<compile_context>
chip_gen: v5e
topology: v5e:2x2
jax: 0.10.0
libtpu: 0.0.40
codegen_flags: <defaults>
</compile_context>

<pallas_src>
import math

import jax
import jax.numpy as jnp
import numpy as np
from jax.experimental import pallas as pl
from jax.experimental.pallas import tpu as pltpu

_GN_EPS = 1e-5
_GN_GROUPS = 32
_LANE = 128


def _erf(x):
    # Abramowitz & Stegun 7.1.26 rational approximation (|err| < 1.5e-7 in f32).
    # The 1/(1 + p*z) divide uses the EUP approx reciprocal (frees VALU bundles).
    a1, a2, a3, a4, a5 = (0.254829592, -0.284496736, 1.421413741,
                          -1.453152027, 1.061405429)
    p = 0.3275911
    sgn = jnp.where(x >= 0.0, 1.0, -1.0)
    z = jnp.abs(x)
    t = pl.reciprocal(1.0 + p * z, approx=True)
    poly = ((((a5 * t + a4) * t + a3) * t + a2) * t + a1) * t
    return sgn * (1.0 - poly * jnp.exp(-z * z))


def _gelu_exact(x):
    # matches torch.nn.GELU() (approximate='none')
    return 0.5 * x * (1.0 + _erf(x * (1.0 / math.sqrt(2.0))))


def _vmem_limit_bytes():
    # Generation-aware: ~3/4 of physical VMEM, capped at 96 MiB.
    # v7x (64 MiB) -> 48 MiB; v5e/v6e (128 MiB) -> 96 MiB.
    try:
        cap = pltpu.get_tpu_info().vmem_capacity_bytes
        return int(min(96 * 1024 * 1024, max(32 * 1024 * 1024, (cap * 3) // 4)))
    except Exception:
        return 64 * 1024 * 1024


def _down_stage(x_nchw, w_oihw, gamma, beta, *, out_dtype):
    """One (conv 3x3 s2 p1, no bias) -> GroupNorm(32) -> GELU stage.

    x: (N, Cin, H, W) NCHW (f32 or bf16).  Returns (N, Cout, Ho, Wo) in `out_dtype`.
    """
    N, Cin, H, W = x_nchw.shape
    Cout = w_oihw.shape[0]
    G = _GN_GROUPS
    assert Cout % G == 0, "GroupNorm(32, out_dim) requires out_dim % 32 == 0"
    cg = Cout // G
    Ho, Wo = (H + 1) // 2, (W + 1) // 2            # k=3, stride=2, pad=1
    P = Ho * Wo
    P_pad = ((P + _LANE - 1) // _LANE) * _LANE     # lane-dense output / MXU N dim

    # Megacore: make the parallel grid >= 2 wide when the batch alone can't
    # (v7x has 2 TensorCores per chip).  GroupNorm groups are channel-contiguous
    # and independent, so splitting Cout along group boundaries is exact.
    csplit = 1 if N % 2 == 0 else 2
    Cb, Gb = Cout // csplit, G // csplit

    # ---- glue (fused under the wrapper jit): one bf16 stride-2 tap slab per sample.
    #   xcol[n, (kh*3+kw)*Cin + c, i*Wo + j] = xpad[n, c, 2i+kh, 2j+kw]
    # so the whole 3x3/s2 conv is ONE (Cout, 9*Cin) x (9*Cin, P_pad) MXU dot with no
    # in-kernel shifted slices.  Lanes >= P are explicit zeros, so the conv result
    # there is exactly 0 and GroupNorm sums are unaffected.
    xb = x_nchw.astype(jnp.bfloat16)
    xp = jnp.pad(xb, ((0, 0), (0, 0), (1, 2 * Ho - H), (1, 2 * Wo - W)))
    taps = [xp[:, :, kh:kh + 2 * Ho - 1:2, kw:kw + 2 * Wo - 1:2]
            for kh in range(3) for kw in range(3)]               # 9 x (N, Cin, Ho, Wo)
    xcol = jnp.stack(taps, axis=1).reshape(N, 9 * Cin, P)
    if P_pad != P:
        xcol = jnp.pad(xcol, ((0, 0), (0, 0), (0, P_pad - P)))

    # conv weight as (csplit, Cout/csplit, 9*Cin), tap-major / channel-minor, bf16
    wk = jnp.transpose(w_oihw, (0, 2, 3, 1)).reshape(Cout, 9 * Cin)
    wk = wk.reshape(csplit, Cb, 9 * Cin).astype(jnp.bfloat16)

    # tiny GroupNorm reduction matrices (constant-fold under jit):
    #   gsum (Gb, Cb): per-group mean over the *logical* P*cg elements
    #   gbc  (Cb, Gb): broadcast group stats back to channels
    gsum_np = np.zeros((Gb, Cb), np.float32)
    gbc_np = np.zeros((Cb, Gb), np.float32)
    for g in range(Gb):
        gsum_np[g, g * cg:(g + 1) * cg] = 1.0 / (P * cg)
        gbc_np[g * cg:(g + 1) * cg, g] = 1.0
    gsum = jnp.asarray(np.broadcast_to(gsum_np, (csplit, Gb, Cb)))
    gbc = jnp.asarray(np.broadcast_to(gbc_np, (csplit, Cb, Gb)))
    gam = gamma.astype(jnp.float32).reshape(csplit, Cb, 1)
    bet = beta.astype(jnp.float32).reshape(csplit, Cb, 1)

    def kernel(xcol_ref, w_ref, gsum_ref, gbc_ref, gamma_ref, beta_ref, o_ref):
        # --- Conv2d(3x3, s=2, p=1, no bias): single bf16 MXU dot (K = 9*Cin),
        #     f32 accumulation, lane-dense (Cb, P_pad) result (already NCHW layout).
        acc = jnp.dot(w_ref[0], xcol_ref[0], preferred_element_type=jnp.float32)

        # --- GroupNorm(32): per-channel [sum, sumsq] -> per-group stats via one
        #     small (Gb, Cb) matmul, broadcast back via a (Cb, Gb) matmul.
        s = jnp.sum(acc, axis=1, keepdims=True)                   # (Cb, 1)
        ss = jnp.sum(acc * acc, axis=1, keepdims=True)            # (Cb, 1)
        st = jnp.concatenate([s, ss], axis=1)                     # (Cb, 2)
        gstat = jnp.dot(gsum_ref[0], st,
                        preferred_element_type=jnp.float32)       # (Gb, 2) = [mean, E[x^2]]
        gmean = gstat[:, 0:1]
        gvar = jnp.maximum(gstat[:, 1:2] - gmean * gmean, 0.0)    # clamp f32 cancellation
        ginv = jax.lax.rsqrt(gvar + _GN_EPS)
        ch = jnp.dot(gbc_ref[0], jnp.concatenate([gmean, ginv], axis=1),
                     preferred_element_type=jnp.float32)          # (Cb, 2) per-channel
        a = ch[:, 1:2] * gamma_ref[0]                             # folded scale
        b = beta_ref[0] - ch[:, 0:1] * a                          # folded shift
        z = acc * a + b                                           # (Cb, P_pad)

        # --- exact (erf-based) GELU; bf16 store for intermediate stages
        o_ref[0] = _gelu_exact(z).astype(o_ref.dtype)

    # TODO(synk): for very large images the (9*Cin, P_pad) slab + (Cout, P_pad) f32
    # temps outgrow v7x's 64 MiB VMEM: add a spatial grid axis with two-pass
    # GroupNorm ([sum,sumsq] scratch accumulated under pl.when) instead of the
    # whole-image block.
    # TODO(synk): fuse consecutive stages into one pallas_call so the shrinking
    # activation stays in VMEM instead of round-tripping HBM per stage.
    out = pl.pallas_call(
        kernel,
        out_shape=jax.ShapeDtypeStruct((N, Cout, P_pad), out_dtype),
        grid=(N, csplit),
        in_specs=[
            pl.BlockSpec((1, 9 * Cin, P_pad), lambda n, c: (n, 0, 0)),
            pl.BlockSpec((1, Cb, 9 * Cin), lambda n, c: (c, 0, 0)),
            pl.BlockSpec((1, Gb, Cb), lambda n, c: (c, 0, 0)),
            pl.BlockSpec((1, Cb, Gb), lambda n, c: (c, 0, 0)),
            pl.BlockSpec((1, Cb, 1), lambda n, c: (c, 0, 0)),
            pl.BlockSpec((1, Cb, 1), lambda n, c: (c, 0, 0)),
        ],
        out_specs=pl.BlockSpec((1, Cb, P_pad), lambda n, c: (n, c, 0)),
        compiler_params=pltpu.CompilerParams(
            dimension_semantics=("parallel", "parallel"),
            vmem_limit_bytes=_vmem_limit_bytes()),
    )(xcol, wk, gsum, gbc, gam, bet)

    # (N, Cout, P) is NCHW with flattened spatial: drop lane padding, no transpose.
    return out[:, :, :P].reshape(N, Cout, Ho, Wo)


def _downsample_impl(x, params):
    n_stage = len(params)
    for idx, (w, g, b) in enumerate(params):
        last = (idx == n_stage - 1)
        x = _down_stage(x, w, g, b,
                        out_dtype=jnp.float32 if last else jnp.bfloat16)
    return x


_downsample_jit = jax.jit(_downsample_impl)


def downsample_conv(x_nchw, params):
    """params: list of (conv_weight (Cout, Cin, 3, 3), gamma (Cout,), beta (Cout,))."""
    if not params:                     # n_down == 0 -> nn.Identity()
        return x_nchw
    return _downsample_jit(x_nchw, tuple(params))


def _reference(x_nchw, params, matmul_dtype=jnp.float32):
    """Pure-JAX reference of the PyTorch forward.  matmul_dtype=bf16 matches the
    kernel's MXU operand precision (f32 accumulation) for a tight comparison."""
    x = x_nchw
    for (w, g, b) in params:
        y = jax.lax.conv_general_dilated(
            x.astype(matmul_dtype), w.astype(matmul_dtype),
            window_strides=(2, 2), padding=((1, 1), (1, 1)),
            dimension_numbers=("NCHW", "OIHW", "NCHW"),
            preferred_element_type=jnp.float32,
            precision=jax.lax.Precision.HIGHEST)
        Nb, C, H, W = y.shape
        yr = y.reshape(Nb, _GN_GROUPS, C // _GN_GROUPS, H, W)
        mean = yr.mean(axis=(2, 3, 4), keepdims=True)
        var = yr.var(axis=(2, 3, 4), keepdims=True)
        yn = ((yr - mean) / jnp.sqrt(var + _GN_EPS)).reshape(Nb, C, H, W)
        yn = yn * g.reshape(1, C, 1, 1) + b.reshape(1, C, 1, 1)
        x = jax.nn.gelu(yn, approximate=False)
    return x


if __name__ == "__main__":
    # The PyTorch module stacks Conv2d(in_dim, out_dim, ...) n_down times, so for
    # n_down > 1 it is only well-formed when in_dim == out_dim; GroupNorm(32, out_dim)
    # requires out_dim % 32 == 0.  Pick in_dim = out_dim = 32, n_down = 2, HW = 16.
    N, IN_DIM, OUT_DIM, HW, N_DOWN = 2, 32, 32, 16, 2

    key = jax.random.PRNGKey(0)
    keys = jax.random.split(key, 2 + N_DOWN)
    x = jax.random.normal(keys[0], (N, IN_DIM, HW, HW), jnp.float32)

    params = []
    for i in range(N_DOWN):
        fan_in = IN_DIM * 9
        w = jax.random.normal(keys[1 + i], (OUT_DIM, IN_DIM, 3, 3),
                              jnp.float32) / math.sqrt(fan_in)
        gamma = jnp.ones((OUT_DIM,), jnp.float32)   # PyTorch GroupNorm default affine
        beta = jnp.zeros((OUT_DIM,), jnp.float32)
        params.append((w, gamma, beta))

    out = jax.block_until_ready(downsample_conv(x, params))
    assert out.shape == (N, OUT_DIM, HW // (2 ** N_DOWN), HW // (2 ** N_DOWN)), out.shape

    # Tight check vs. a matmul-precision-matched reference (bf16 operands, f32 accum).
    ref_bf16 = jax.block_until_ready(_reference(x, params, jnp.bfloat16))
    np.testing.assert_allclose(np.asarray(out), np.asarray(ref_bf16),
                               rtol=1e-2, atol=1e-2)

    # Looser check vs. the full-f32 PyTorch-equivalent forward (bf16 MXU rounding noise).
    ref_f32 = jax.block_until_ready(_reference(x, params, jnp.float32))
    np.testing.assert_allclose(np.asarray(out), np.asarray(ref_f32),
                               rtol=2.5e-2, atol=2.5e-2)

    # Odd/rectangular spatial + batch 1: exercises the asymmetric-padding tap geometry
    # and the Cout group-split ("parallel" width >= 2) megacore path.
    x_odd = jax.random.normal(keys[-1], (1, IN_DIM, 13, 10), jnp.float32)
    out_odd = jax.block_until_ready(downsample_conv(x_odd, params))
    assert out_odd.shape == (1, OUT_DIM, 4, 3), out_odd.shape
    ref_odd = jax.block_until_ready(_reference(x_odd, params, jnp.float32))
    np.testing.assert_allclose(np.asarray(out_odd), np.asarray(ref_odd),
                               rtol=2.5e-2, atol=2.5e-2)

    print("KERNEL_OK")
</pallas_src>

<mosaic_0001>
module attributes {stable_mosaic.version = 11 : i64} {
  func.func @kernel(%arg0: i32, %arg1: i32, %arg2: memref<1x288x128xbf16, #tpu.memory_space<vmem>>, %arg3: memref<1x32x288xbf16, #tpu.memory_space<vmem>>, %arg4: memref<1x32x32xf32, #tpu.memory_space<vmem>>, %arg5: memref<1x32x32xf32, #tpu.memory_space<vmem>>, %arg6: memref<1x32x1xf32, #tpu.memory_space<vmem>>, %arg7: memref<1x32x1xf32, #tpu.memory_space<vmem>>, %arg8: memref<1x32x128xbf16, #tpu.memory_space<vmem>>) attributes {dimension_semantics = [#tpu.dimension_semantics<parallel>, #tpu.dimension_semantics<parallel>], iteration_bounds = array<i64: 2, 1>, scalar_prefetch = 0 : i64, scratch_operands = 0 : i64, tpu.core_type = #tpu.core_type<tc>, window_params = [{transform_indices = @transform_0, window_bounds = array<i64: 1, 288, 128>}, {transform_indices = @transform_1, window_bounds = array<i64: 1, 32, 288>}, {transform_indices = @transform_2, window_bounds = array<i64: 1, 32, 32>}, {transform_indices = @transform_3, window_bounds = array<i64: 1, 32, 32>}, {transform_indices = @transform_4, window_bounds = array<i64: 1, 32, 1>}, {transform_indices = @transform_5, window_bounds = array<i64: 1, 32, 1>}, {transform_indices = @transform_6, window_bounds = array<i64: 1, 32, 128>}]} {
    %c0 = arith.constant 0 : index
    %c0_0 = arith.constant 0 : index
    %c0_1 = arith.constant 0 : index
    %0 = vector.load %arg3[%c0, %c0_0, %c0_1] : memref<1x32x288xbf16, #tpu.memory_space<vmem>>, vector<1x32x288xbf16>
    %1 = vector.shape_cast %0 : vector<1x32x288xbf16> to vector<32x288xbf16>
    %c0_2 = arith.constant 0 : index
    %c0_3 = arith.constant 0 : index
    %c0_4 = arith.constant 0 : index
    %2 = vector.load %arg2[%c0_2, %c0_3, %c0_4] : memref<1x288x128xbf16, #tpu.memory_space<vmem>>, vector<1x288x128xbf16>
    %3 = vector.shape_cast %2 : vector<1x288x128xbf16> to vector<288x128xbf16>
    %cst = arith.constant dense<0.000000e+00> : vector<32x128xf32>
    %4 = tpu.matmul %1, %3, %cst {dimension_numbers = #tpu.dot_dimension_numbers<[1], [0], [0], [1], [0, 0, 1, 1], [], []>} : vector<32x288xbf16>, vector<288x128xbf16>, vector<32x128xf32> -> vector<32x128xf32>
    %cst_5 = arith.constant dense<0.000000e+00> : vector<32xf32>
    %5 = vector.multi_reduction <add>, %4, %cst_5 [1] : vector<32x128xf32> to vector<32xf32>
    %6 = vector.shape_cast %5 : vector<32xf32> to vector<32x1xf32>
    %7 = arith.mulf %4, %4 : vector<32x128xf32>
    %cst_6 = arith.constant dense<0.000000e+00> : vector<32xf32>
    %8 = vector.multi_reduction <add>, %7, %cst_6 [1] : vector<32x128xf32> to vector<32xf32>
    %9 = vector.shape_cast %8 : vector<32xf32> to vector<32x1xf32>
    %10 = tpu.concatenate %6, %9 in 1 : vector<32x1xf32>, vector<32x1xf32> -> vector<32x2xf32>
    %c0_7 = arith.constant 0 : index
    %c0_8 = arith.constant 0 : index
    %c0_9 = arith.constant 0 : index
    %11 = vector.load %arg4[%c0_7, %c0_8, %c0_9] : memref<1x32x32xf32, #tpu.memory_space<vmem>>, vector<1x32x32xf32>
    %12 = vector.shape_cast %11 : vector<1x32x32xf32> to vector<32x32xf32>
    %cst_10 = arith.constant dense<0.000000e+00> : vector<32x2xf32>
    %13 = tpu.matmul %12, %10, %cst_10 {dimension_numbers = #tpu.dot_dimension_numbers<[1], [0], [0], [1], [0, 0, 1, 1], [], []>} : vector<32x32xf32>, vector<32x2xf32>, vector<32x2xf32> -> vector<32x2xf32>
    %14 = vector.extract_strided_slice %13 {offsets = [0, 0], sizes = [32, 1], strides = [1, 1]} : vector<32x2xf32> to vector<32x1xf32>
    %15 = vector.extract_strided_slice %13 {offsets = [0, 1], sizes = [32, 1], strides = [1, 1]} : vector<32x2xf32> to vector<32x1xf32>
    %16 = arith.mulf %14, %14 : vector<32x1xf32>
    %17 = arith.subf %15, %16 : vector<32x1xf32>
    %cst_11 = arith.constant 0.000000e+00 : f32
    %18 = vector.broadcast %cst_11 : f32 to vector<32x1xf32>
    %19 = arith.maximumf %17, %18 : vector<32x1xf32>
    %cst_12 = arith.constant 9.99999974E-6 : f32
    %20 = vector.broadcast %cst_12 : f32 to vector<32x1xf32>
    %21 = arith.addf %19, %20 : vector<32x1xf32>
    %22 = math.rsqrt %21 : vector<32x1xf32>
    %c0_13 = arith.constant 0 : index
    %c0_14 = arith.constant 0 : index
    %c0_15 = arith.constant 0 : index
    %23 = vector.load %arg5[%c0_13, %c0_14, %c0_15] : memref<1x32x32xf32, #tpu.memory_space<vmem>>, vector<1x32x32xf32>
    %24 = vector.shape_cast %23 : vector<1x32x32xf32> to vector<32x32xf32>
    %25 = tpu.concatenate %14, %22 in 1 : vector<32x1xf32>, vector<32x1xf32> -> vector<32x2xf32>
    %cst_16 = arith.constant dense<0.000000e+00> : vector<32x2xf32>
    %26 = tpu.matmul %24, %25, %cst_16 {dimension_numbers = #tpu.dot_dimension_numbers<[1], [0], [0], [1], [0, 0, 1, 1], [], []>} : vector<32x32xf32>, vector<32x2xf32>, vector<32x2xf32> -> vector<32x2xf32>
    %27 = vector.extract_strided_slice %26 {offsets = [0, 1], sizes = [32, 1], strides = [1, 1]} : vector<32x2xf32> to vector<32x1xf32>
    %c0_17 = arith.constant 0 : index
    %c0_18 = arith.constant 0 : index
    %c0_19 = arith.constant 0 : index
    %28 = vector.load %arg6[%c0_17, %c0_18, %c0_19] : memref<1x32x1xf32, #tpu.memory_space<vmem>>, vector<1x32x1xf32>
    %29 = vector.shape_cast %28 : vector<1x32x1xf32> to vector<32x1xf32>
    %30 = arith.mulf %27, %29 : vector<32x1xf32>
    %c0_20 = arith.constant 0 : index
    %c0_21 = arith.constant 0 : index
    %c0_22 = arith.constant 0 : index
    %31 = vector.load %arg7[%c0_20, %c0_21, %c0_22] : memref<1x32x1xf32, #tpu.memory_space<vmem>>, vector<1x32x1xf32>
    %32 = vector.shape_cast %31 : vector<1x32x1xf32> to vector<32x1xf32>
    %33 = vector.extract_strided_slice %26 {offsets = [0, 0], sizes = [32, 1], strides = [1, 1]} : vector<32x2xf32> to vector<32x1xf32>
    %34 = arith.mulf %33, %30 : vector<32x1xf32>
    %35 = arith.subf %32, %34 : vector<32x1xf32>
    %36 = vector.broadcast %30 : vector<32x1xf32> to vector<32x128xf32>
    %37 = arith.mulf %4, %36 : vector<32x128xf32>
    %38 = vector.broadcast %35 : vector<32x1xf32> to vector<32x128xf32>
    %39 = arith.addf %37, %38 : vector<32x128xf32>
    %cst_23 = arith.constant 5.000000e-01 : f32
    %40 = vector.broadcast %cst_23 : f32 to vector<32x128xf32>
    %41 = arith.mulf %40, %39 : vector<32x128xf32>
    %cst_24 = arith.constant 0.707106769 : f32
    %42 = vector.broadcast %cst_24 : f32 to vector<32x128xf32>
    %43 = arith.mulf %39, %42 : vector<32x128xf32>
    %cst_25 = arith.constant 0.000000e+00 : f32
    %44 = vector.broadcast %cst_25 : f32 to vector<32x128xf32>
    %45 = arith.cmpf oge, %43, %44 : vector<32x128xf32>
    %cst_26 = arith.constant 1.000000e+00 : f32
    %cst_27 = arith.constant -1.000000e+00 : f32
    %46 = vector.broadcast %cst_26 : f32 to vector<32x128xf32>
    %47 = vector.broadcast %cst_27 : f32 to vector<32x128xf32>
    %48 = arith.select %45, %46, %47 : vector<32x128xi1>, vector<32x128xf32>
    %49 = math.absf %43 : vector<32x128xf32>
    %cst_28 = arith.constant 0.327591091 : f32
    %50 = vector.broadcast %cst_28 : f32 to vector<32x128xf32>
    %51 = arith.mulf %50, %49 : vector<32x128xf32>
    %cst_29 = arith.constant 1.000000e+00 : f32
    %52 = vector.broadcast %cst_29 : f32 to vector<32x128xf32>
    %53 = arith.addf %52, %51 : vector<32x128xf32>
    %54 = tpu.reciprocal %53 {approx = true} : vector<32x128xf32> -> vector<32x128xf32>
    %cst_30 = arith.constant 1.06140542 : f32
    %55 = vector.broadcast %cst_30 : f32 to vector<32x128xf32>
    %56 = arith.mulf %55, %54 : vector<32x128xf32>
    %cst_31 = arith.constant -1.45315206 : f32
    %57 = vector.broadcast %cst_31 : f32 to vector<32x128xf32>
    %58 = arith.addf %56, %57 : vector<32x128xf32>
    %59 = arith.mulf %58, %54 : vector<32x128xf32>
    %cst_32 = arith.constant 1.42141378 : f32
    %60 = vector.broadcast %cst_32 : f32 to vector<32x128xf32>
    %61 = arith.addf %59, %60 : vector<32x128xf32>
    %62 = arith.mulf %61, %54 : vector<32x128xf32>
    %cst_33 = arith.constant -0.284496725 : f32
    %63 = vector.broadcast %cst_33 : f32 to vector<32x128xf32>
    %64 = arith.addf %62, %63 : vector<32x128xf32>
    %65 = arith.mulf %64, %54 : vector<32x128xf32>
    %cst_34 = arith.constant 0.254829586 : f32
    %66 = vector.broadcast %cst_34 : f32 to vector<32x128xf32>
    %67 = arith.addf %65, %66 : vector<32x128xf32>
    %68 = arith.mulf %67, %54 : vector<32x128xf32>
    %cst_35 = arith.constant 0.000000e+00 : f32
    %69 = vector.broadcast %cst_35 : f32 to vector<32x128xf32>
    %70 = arith.subf %69, %49 : vector<32x128xf32>
    %71 = arith.mulf %70, %49 : vector<32x128xf32>
    %72 = math.exp %71 : vector<32x128xf32>
    %73 = arith.mulf %68, %72 : vector<32x128xf32>
    %cst_36 = arith.constant 1.000000e+00 : f32
    %74 = vector.broadcast %cst_36 : f32 to vector<32x128xf32>
    %75 = arith.subf %74, %73 : vector<32x128xf32>
    %76 = arith.mulf %48, %75 : vector<32x128xf32>
    %cst_37 = arith.constant 1.000000e+00 : f32
    %77 = vector.broadcast %cst_37 : f32 to vector<32x128xf32>
    %78 = arith.addf %77, %76 : vector<32x128xf32>
    %79 = arith.mulf %41, %78 : vector<32x128xf32>
    %80 = arith.truncf %79 : vector<32x128xf32> to vector<32x128xbf16>
    %c0_38 = arith.constant 0 : index
    %c0_39 = arith.constant 0 : index
    %c0_40 = arith.constant 0 : index
    %81 = vector.load %arg8[%c0_38, %c0_39, %c0_40] : memref<1x32x128xbf16, #tpu.memory_space<vmem>>, vector<1x32x128xbf16>
    %82 = vector.shape_cast %81 : vector<1x32x128xbf16> to vector<32x128xbf16>
    %83 = vector.shape_cast %80 : vector<32x128xbf16> to vector<1x32x128xbf16>
    tpu.vector_store %arg8[%c0_38, %c0_39, %c0_40], %83 {strides = array<i32>} : memref<1x32x128xbf16, #tpu.memory_space<vmem>>, vector<1x32x128xbf16>,
    return
  }
  func.func @transform_0(%arg0: i32, %arg1: i32) -> (i32, i32, i32) {
    %c0_i32 = arith.constant 0 : i32
    %c0_i32_0 = arith.constant 0 : i32
    %c0_i32_1 = arith.constant 0 : i32
    return %arg0, %c0_i32, %c0_i32_0 : i32, i32, i32
  }
  func.func @transform_1(%arg0: i32, %arg1: i32) -> (i32, i32, i32) {
    %c0_i32 = arith.constant 0 : i32
    %c0_i32_0 = arith.constant 0 : i32
    %c0_i32_1 = arith.constant 0 : i32
    return %arg1, %c0_i32, %c0_i32_0 : i32, i32, i32
  }
  func.func @transform_2(%arg0: i32, %arg1: i32) -> (i32, i32, i32) {
    %c0_i32 = arith.constant 0 : i32
    %c0_i32_0 = arith.constant 0 : i32
    %c0_i32_1 = arith.constant 0 : i32
    return %arg1, %c0_i32, %c0_i32_0 : i32, i32, i32
  }
  func.func @transform_3(%arg0: i32, %arg1: i32) -> (i32, i32, i32) {
    %c0_i32 = arith.constant 0 : i32
    %c0_i32_0 = arith.constant 0 : i32
    %c0_i32_1 = arith.constant 0 : i32
    return %arg1, %c0_i32, %c0_i32_0 : i32, i32, i32
  }
  func.func @transform_4(%arg0: i32, %arg1: i32) -> (i32, i32, i32) {
    %c0_i32 = arith.constant 0 : i32
    %c0_i32_0 = arith.constant 0 : i32
    %c0_i32_1 = arith.constant 0 : i32
    return %arg1, %c0_i32, %c0_i32_0 : i32, i32, i32
  }
  func.func @transform_5(%arg0: i32, %arg1: i32) -> (i32, i32, i32) {
    %c0_i32 = arith.constant 0 : i32
    %c0_i32_0 = arith.constant 0 : i32
    %c0_i32_1 = arith.constant 0 : i32
    return %arg1, %c0_i32, %c0_i32_0 : i32, i32, i32
  }
  func.func @transform_6(%arg0: i32, %arg1: i32) -> (i32, i32, i32) {
    %c0_i32 = arith.constant 0 : i32
    %c0_i32_0 = arith.constant 0 : i32
    return %arg0, %arg1, %c0_i32 : i32, i32, i32
  }
}

module attributes {stable_mosaic.version = 11 : i64} {
  func.func @kernel(%arg0: i32, %arg1: i32, %arg2: memref<1x288x128xbf16, #tpu.memory_space<vmem>>, %arg3: memref<1x32x288xbf16, #tpu.memory_space<vmem>>, %arg4: memref<1x32x32xf32, #tpu.memory_space<vmem>>, %arg5: memref<1x32x32xf32, #tpu.memory_space<vmem>>, %arg6: memref<1x32x1xf32, #tpu.memory_space<vmem>>, %arg7: memref<1x32x1xf32, #tpu.memory_space<vmem>>, %arg8: memref<1x32x128xf32, #tpu.memory_space<vmem>>) attributes {dimension_semantics = [#tpu.dimension_semantics<parallel>, #tpu.dimension_semantics<parallel>], iteration_bounds = array<i64: 2, 1>, scalar_prefetch = 0 : i64, scratch_operands = 0 : i64, tpu.core_type = #tpu.core_type<tc>, window_params = [{transform_indices = @transform_0, window_bounds = array<i64: 1, 288, 128>}, {transform_indices = @transform_1, window_bounds = array<i64: 1, 32, 288>}, {transform_indices = @transform_2, window_bounds = array<i64: 1, 32, 32>}, {transform_indices = @transform_3, window_bounds = array<i64: 1, 32, 32>}, {transform_indices = @transform_4, window_bounds = array<i64: 1, 32, 1>}, {transform_indices = @transform_5, window_bounds = array<i64: 1, 32, 1>}, {transform_indices = @transform_6, window_bounds = array<i64: 1, 32, 128>}]} {
    %c0 = arith.constant 0 : index
    %c0_0 = arith.constant 0 : index
    %c0_1 = arith.constant 0 : index
    %0 = vector.load %arg3[%c0, %c0_0, %c0_1] : memref<1x32x288xbf16, #tpu.memory_space<vmem>>, vector<1x32x288xbf16>
    %1 = vector.shape_cast %0 : vector<1x32x288xbf16> to vector<32x288xbf16>
    %c0_2 = arith.constant 0 : index
    %c0_3 = arith.constant 0 : index
    %c0_4 = arith.constant 0 : index
    %2 = vector.load %arg2[%c0_2, %c0_3, %c0_4] : memref<1x288x128xbf16, #tpu.memory_space<vmem>>, vector<1x288x128xbf16>
    %3 = vector.shape_cast %2 : vector<1x288x128xbf16> to vector<288x128xbf16>
    %cst = arith.constant dense<0.000000e+00> : vector<32x128xf32>
    %4 = tpu.matmul %1, %3, %cst {dimension_numbers = #tpu.dot_dimension_numbers<[1], [0], [0], [1], [0, 0, 1, 1], [], []>} : vector<32x288xbf16>, vector<288x128xbf16>, vector<32x128xf32> -> vector<32x128xf32>
    %cst_5 = arith.constant dense<0.000000e+00> : vector<32xf32>
    %5 = vector.multi_reduction <add>, %4, %cst_5 [1] : vector<32x128xf32> to vector<32xf32>
    %6 = vector.shape_cast %5 : vector<32xf32> to vector<32x1xf32>
    %7 = arith.mulf %4, %4 : vector<32x128xf32>
    %cst_6 = arith.constant dense<0.000000e+00> : vector<32xf32>
    %8 = vector.multi_reduction <add>, %7, %cst_6 [1] : vector<32x128xf32> to vector<32xf32>
    %9 = vector.shape_cast %8 : vector<32xf32> to vector<32x1xf32>
    %10 = tpu.concatenate %6, %9 in 1 : vector<32x1xf32>, vector<32x1xf32> -> vector<32x2xf32>
    %c0_7 = arith.constant 0 : index
    %c0_8 = arith.constant 0 : index
    %c0_9 = arith.constant 0 : index
    %11 = vector.load %arg4[%c0_7, %c0_8, %c0_9] : memref<1x32x32xf32, #tpu.memory_space<vmem>>, vector<1x32x32xf32>
    %12 = vector.shape_cast %11 : vector<1x32x32xf32> to vector<32x32xf32>
    %cst_10 = arith.constant dense<0.000000e+00> : vector<32x2xf32>
    %13 = tpu.matmul %12, %10, %cst_10 {dimension_numbers = #tpu.dot_dimension_numbers<[1], [0], [0], [1], [0, 0, 1, 1], [], []>} : vector<32x32xf32>, vector<32x2xf32>, vector<32x2xf32> -> vector<32x2xf32>
    %14 = vector.extract_strided_slice %13 {offsets = [0, 0], sizes = [32, 1], strides = [1, 1]} : vector<32x2xf32> to vector<32x1xf32>
    %15 = vector.extract_strided_slice %13 {offsets = [0, 1], sizes = [32, 1], strides = [1, 1]} : vector<32x2xf32> to vector<32x1xf32>
    %16 = arith.mulf %14, %14 : vector<32x1xf32>
    %17 = arith.subf %15, %16 : vector<32x1xf32>
    %cst_11 = arith.constant 0.000000e+00 : f32
    %18 = vector.broadcast %cst_11 : f32 to vector<32x1xf32>
    %19 = arith.maximumf %17, %18 : vector<32x1xf32>
    %cst_12 = arith.constant 9.99999974E-6 : f32
    %20 = vector.broadcast %cst_12 : f32 to vector<32x1xf32>
    %21 = arith.addf %19, %20 : vector<32x1xf32>
    %22 = math.rsqrt %21 : vector<32x1xf32>
    %c0_13 = arith.constant 0 : index
    %c0_14 = arith.constant 0 : index
    %c0_15 = arith.constant 0 : index
    %23 = vector.load %arg5[%c0_13, %c0_14, %c0_15] : memref<1x32x32xf32, #tpu.memory_space<vmem>>, vector<1x32x32xf32>
    %24 = vector.shape_cast %23 : vector<1x32x32xf32> to vector<32x32xf32>
    %25 = tpu.concatenate %14, %22 in 1 : vector<32x1xf32>, vector<32x1xf32> -> vector<32x2xf32>
    %cst_16 = arith.constant dense<0.000000e+00> : vector<32x2xf32>
    %26 = tpu.matmul %24, %25, %cst_16 {dimension_numbers = #tpu.dot_dimension_numbers<[1], [0], [0], [1], [0, 0, 1, 1], [], []>} : vector<32x32xf32>, vector<32x2xf32>, vector<32x2xf32> -> vector<32x2xf32>
    %27 = vector.extract_strided_slice %26 {offsets = [0, 1], sizes = [32, 1], strides = [1, 1]} : vector<32x2xf32> to vector<32x1xf32>
    %c0_17 = arith.constant 0 : index
    %c0_18 = arith.constant 0 : index
    %c0_19 = arith.constant 0 : index
    %28 = vector.load %arg6[%c0_17, %c0_18, %c0_19] : memref<1x32x1xf32, #tpu.memory_space<vmem>>, vector<1x32x1xf32>
    %29 = vector.shape_cast %28 : vector<1x32x1xf32> to vector<32x1xf32>
    %30 = arith.mulf %27, %29 : vector<32x1xf32>
    %c0_20 = arith.constant 0 : index
    %c0_21 = arith.constant 0 : index
    %c0_22 = arith.constant 0 : index
    %31 = vector.load %arg7[%c0_20, %c0_21, %c0_22] : memref<1x32x1xf32, #tpu.memory_space<vmem>>, vector<1x32x1xf32>
    %32 = vector.shape_cast %31 : vector<1x32x1xf32> to vector<32x1xf32>
    %33 = vector.extract_strided_slice %26 {offsets = [0, 0], sizes = [32, 1], strides = [1, 1]} : vector<32x2xf32> to vector<32x1xf32>
    %34 = arith.mulf %33, %30 : vector<32x1xf32>
    %35 = arith.subf %32, %34 : vector<32x1xf32>
    %36 = vector.broadcast %30 : vector<32x1xf32> to vector<32x128xf32>
    %37 = arith.mulf %4, %36 : vector<32x128xf32>
    %38 = vector.broadcast %35 : vector<32x1xf32> to vector<32x128xf32>
    %39 = arith.addf %37, %38 : vector<32x128xf32>
    %cst_23 = arith.constant 5.000000e-01 : f32
    %40 = vector.broadcast %cst_23 : f32 to vector<32x128xf32>
    %41 = arith.mulf %40, %39 : vector<32x128xf32>
    %cst_24 = arith.constant 0.707106769 : f32
    %42 = vector.broadcast %cst_24 : f32 to vector<32x128xf32>
    %43 = arith.mulf %39, %42 : vector<32x128xf32>
    %cst_25 = arith.constant 0.000000e+00 : f32
    %44 = vector.broadcast %cst_25 : f32 to vector<32x128xf32>
    %45 = arith.cmpf oge, %43, %44 : vector<32x128xf32>
    %cst_26 = arith.constant 1.000000e+00 : f32
    %cst_27 = arith.constant -1.000000e+00 : f32
    %46 = vector.broadcast %cst_26 : f32 to vector<32x128xf32>
    %47 = vector.broadcast %cst_27 : f32 to vector<32x128xf32>
    %48 = arith.select %45, %46, %47 : vector<32x128xi1>, vector<32x128xf32>
    %49 = math.absf %43 : vector<32x128xf32>
    %cst_28 = arith.constant 0.327591091 : f32
    %50 = vector.broadcast %cst_28 : f32 to vector<32x128xf32>
    %51 = arith.mulf %50, %49 : vector<32x128xf32>
    %cst_29 = arith.constant 1.000000e+00 : f32
    %52 = vector.broadcast %cst_29 : f32 to vector<32x128xf32>
    %53 = arith.addf %52, %51 : vector<32x128xf32>
    %54 = tpu.reciprocal %53 {approx = true} : vector<32x128xf32> -> vector<32x128xf32>
    %cst_30 = arith.constant 1.06140542 : f32
    %55 = vector.broadcast %cst_30 : f32 to vector<32x128xf32>
    %56 = arith.mulf %55, %54 : vector<32x128xf32>
    %cst_31 = arith.constant -1.45315206 : f32
    %57 = vector.broadcast %cst_31 : f32 to vector<32x128xf32>
    %58 = arith.addf %56, %57 : vector<32x128xf32>
    %59 = arith.mulf %58, %54 : vector<32x128xf32>
    %cst_32 = arith.constant 1.42141378 : f32
    %60 = vector.broadcast %cst_32 : f32 to vector<32x128xf32>
    %61 = arith.addf %59, %60 : vector<32x128xf32>
    %62 = arith.mulf %61, %54 : vector<32x128xf32>
    %cst_33 = arith.constant -0.284496725 : f32
    %63 = vector.broadcast %cst_33 : f32 to vector<32x128xf32>
    %64 = arith.addf %62, %63 : vector<32x128xf32>
    %65 = arith.mulf %64, %54 : vector<32x128xf32>
    %cst_34 = arith.constant 0.254829586 : f32
    %66 = vector.broadcast %cst_34 : f32 to vector<32x128xf32>
    %67 = arith.addf %65, %66 : vector<32x128xf32>
    %68 = arith.mulf %67, %54 : vector<32x128xf32>
    %cst_35 = arith.constant 0.000000e+00 : f32
    %69 = vector.broadcast %cst_35 : f32 to vector<32x128xf32>
    %70 = arith.subf %69, %49 : vector<32x128xf32>
    %71 = arith.mulf %70, %49 : vector<32x128xf32>
    %72 = math.exp %71 : vector<32x128xf32>
    %73 = arith.mulf %68, %72 : vector<32x128xf32>
    %cst_36 = arith.constant 1.000000e+00 : f32
    %74 = vector.broadcast %cst_36 : f32 to vector<32x128xf32>
    %75 = arith.subf %74, %73 : vector<32x128xf32>
    %76 = arith.mulf %48, %75 : vector<32x128xf32>
    %cst_37 = arith.constant 1.000000e+00 : f32
    %77 = vector.broadcast %cst_37 : f32 to vector<32x128xf32>
    %78 = arith.addf %77, %76 : vector<32x128xf32>
    %79 = arith.mulf %41, %78 : vector<32x128xf32>
    %c0_38 = arith.constant 0 : index
    %c0_39 = arith.constant 0 : index
    %c0_40 = arith.constant 0 : index
    %80 = vector.load %arg8[%c0_38, %c0_39, %c0_40] : memref<1x32x128xf32, #tpu.memory_space<vmem>>, vector<1x32x128xf32>
    %81 = vector.shape_cast %80 : vector<1x32x128xf32> to vector<32x128xf32>
    %82 = vector.shape_cast %79 : vector<32x128xf32> to vector<1x32x128xf32>
    tpu.vector_store %arg8[%c0_38, %c0_39, %c0_40], %82 {strides = array<i32>} : memref<1x32x128xf32, #tpu.memory_space<vmem>>, vector<1x32x128xf32>,
    return
  }
  func.func @transform_0(%arg0: i32, %arg1: i32) -> (i32, i32, i32) {
    %c0_i32 = arith.constant 0 : i32
    %c0_i32_0 = arith.constant 0 : i32
    %c0_i32_1 = arith.constant 0 : i32
    return %arg0, %c0_i32, %c0_i32_0 : i32, i32, i32
  }
  func.func @transform_1(%arg0: i32, %arg1: i32) -> (i32, i32, i32) {
    %c0_i32 = arith.constant 0 : i32
    %c0_i32_0 = arith.constant 0 : i32
    %c0_i32_1 = arith.constant 0 : i32
    return %arg1, %c0_i32, %c0_i32_0 : i32, i32, i32
  }
  func.func @transform_2(%arg0: i32, %arg1: i32) -> (i32, i32, i32) {
    %c0_i32 = arith.constant 0 : i32
    %c0_i32_0 = arith.constant 0 : i32
    %c0_i32_1 = arith.constant 0 : i32
    return %arg1, %c0_i32, %c0_i32_0 : i32, i32, i32
  }
  func.func @transform_3(%arg0: i32, %arg1: i32) -> (i32, i32, i32) {
    %c0_i32 = arith.constant 0 : i32
    %c0_i32_0 = arith.constant 0 : i32
    %c0_i32_1 = arith.constant 0 : i32
    return %arg1, %c0_i32, %c0_i32_0 : i32, i32, i32
  }
  func.func @transform_4(%arg0: i32, %arg1: i32) -> (i32, i32, i32) {
    %c0_i32 = arith.constant 0 : i32
    %c0_i32_0 = arith.constant 0 : i32
    %c0_i32_1 = arith.constant 0 : i32
    return %arg1, %c0_i32, %c0_i32_0 : i32, i32, i32
  }
  func.func @transform_5(%arg0: i32, %arg1: i32) -> (i32, i32, i32) {
    %c0_i32 = arith.constant 0 : i32
    %c0_i32_0 = arith.constant 0 : i32
    %c0_i32_1 = arith.constant 0 : i32
    return %arg1, %c0_i32, %c0_i32_0 : i32, i32, i32
  }
  func.func @transform_6(%arg0: i32, %arg1: i32) -> (i32, i32, i32) {
    %c0_i32 = arith.constant 0 : i32
    %c0_i32_0 = arith.constant 0 : i32
    return %arg0, %arg1, %c0_i32 : i32, i32, i32
  }
}

</mosaic_0001>

<llo_original>
// kernel: _downsample_impl.2
$region0: #{_downsample_impl.2}
  #allocation0 [shape = 'u32[]', space=smem, size = 0x4, offset = 0x4, fixed_abs, tag = 'smem constant byte address 0x4 - core index']
  #allocation1 [shape = 'u32[72,128]{1,0:T(1,128)}', space=vmem, size = 0x9000, scoped, tag = 'internal scratch']
  %s0 = inlined_call_operand.vmem [shape: bf16[2,288,128], index: 0, kind: input, shape index: {}]
  %s1 = inlined_call_operand.vmem [shape: bf16[1,32,288], index: 1, kind: input, shape index: {}]
  %s2 = inlined_call_operand.vmem [shape: f32[1,32,32], index: 2, kind: input, shape index: {}]
  %s3 = inlined_call_operand.vmem [shape: f32[1,32,32], index: 3, kind: input, shape index: {}]
  %s4 = inlined_call_operand.vmem [shape: f32[1,32,1], index: 4, kind: input, shape index: {}]
  %s5 = inlined_call_operand.vmem [shape: f32[1,32,1], index: 5, kind: input, shape index: {}]
  %s6 = inlined_call_operand.vmem [shape: bf16[2,32,128], index: 6, kind: output, shape index: {}]
  %s7 = sld [smem:[#allocation0]]
  $region57: #{_downsample_impl.2} parent=0
    _
  %s9 = ssub.s32 1, %s7
  %s10 = scalar_select 0, %s9, %s7
  loop: start=0, step=1, limit=4
  $region2: #{_downsample_impl.2} parent=0 // loop_pre_header
    _
  $region3: #{_downsample_impl.2} parent=0 // loop_header
    %s12 = sphi 0, %s16
    %p13 = scmp.ge.s32.totalorder %s12, 4
    %s19 = sphi 0, %s31
    %s20 = sphi 0, %s27
    %s21 = sphi 0, %s19
    %s22 = sphi 0, %s20
    %s23 = sphi 0, %s21
    %s24 = sphi 0, %s22
    %s34 = sphi 0, %s36
    %s37 = sphi 0, %s34
    %s38 = sphi 0, %s37
    %s54 = sphi 0, %s38
    %s60 = sphi 0, %s62
    %s63 = sphi 0, %s60
    %s64 = sphi 0, %s63
    %s80 = sphi 0, %s64
    %s86 = sphi 0, %s88
    %s89 = sphi 0, %s86
    %s90 = sphi 0, %s89
    %s106 = sphi 0, %s90
    %s112 = sphi 0, %s114
    %s115 = sphi 0, %s112
    %s116 = sphi 0, %s115
    %s132 = sphi 0, %s116
    %s138 = sphi 0, %s140
    %s141 = sphi 0, %s138
    %s142 = sphi 0, %s141
    %s158 = sphi 0, %s142
    %s164 = sphi 0, %s166
    %s167 = sphi 0, %s164
    %s168 = sphi 0, %s167
    %s184 = sphi 0, %s168
    %s192 = sphi 0, %s194
    %s195 = sphi 0, %s192
    %s196 = sphi 0, %s195
    %s212 = sphi 0, %s196
  $region4: #{_downsample_impl.2} parent=0 // loop_header_branch
    %15 = sbr.rel (%p13) target = $region8
  $region5: #{_downsample_impl.2} parent=0 // loop_body
    %s17 = ssub.s32 %s12, 1
    %s18 = ssub.s32 %s12, 2
    %s25 = sadd.s32 1, %s20
    %p26 = scmp.ge.s32.totalorder %s25, 1
    %s27 = scalar_select %p26, 0, %s25
    %s28 = sadd.s32 1, %s19
    %s29 = scalar_select %p26, %s28, %s19
    %p30 = scmp.ge.s32.totalorder %s29, 2
    %s31 = scalar_select %p30, 0, %s29
    %s32 = ssub.s32 %s19, %s31
    %p33 = scmp.eq.s32.totalorder %s32, 0
    %s35 = sadd.s32 %s34, 1
    %s36 = scalar_select %p33, %s34, %s35
    %p39 = pneg %p33
    %p40 = scmp.eq.s32.totalorder %s12, 1
    %p41 = por %p39, %p40
    %p42 = scmp.ne.s32.totalorder %s34, %s37
    %p43 = scmp.eq.s32.totalorder %s12, 0
    %p44 = por %p42, %p43
    %p45 = scmp.ne.s32.totalorder %s34, %s37
    %p46 = scmp.eq.s32.totalorder %s17, 1
    %p47 = por %p45, %p46
    %p48 = scmp.ne.s32.totalorder %s37, %s38
    %p49 = scmp.eq.s32.totalorder %s17, 0
    %p50 = por %p48, %p49
    %p51 = scmp.ne.s32.totalorder %s37, %s38
    %p52 = scmp.eq.s32.totalorder %s18, 1
    %p53 = por %p51, %p52
    %p55 = scmp.ne.s32.totalorder %s38, %s54
    %p56 = scmp.eq.s32.totalorder %s18, 0
    %p57 = por %p55, %p56
    %s58 = ssub.s32 %s20, %s27
    %p59 = scmp.eq.s32.totalorder %s58, 0
    %s61 = sadd.s32 %s60, 1
    %s62 = scalar_select %p59, %s60, %s61
    %p65 = pneg %p59
    %p66 = scmp.eq.s32.totalorder %s12, 1
    %p67 = por %p65, %p66
    %p68 = scmp.ne.s32.totalorder %s60, %s63
    %p69 = scmp.eq.s32.totalorder %s12, 0
    %p70 = por %p68, %p69
    %p71 = scmp.ne.s32.totalorder %s60, %s63
    %p72 = scmp.eq.s32.totalorder %s17, 1
    %p73 = por %p71, %p72
    %p74 = scmp.ne.s32.totalorder %s63, %s64
    %p75 = scmp.eq.s32.totalorder %s17, 0
    %p76 = por %p74, %p75
    %p77 = scmp.ne.s32.totalorder %s63, %s64
    %p78 = scmp.eq.s32.totalorder %s18, 1
    %p79 = por %p77, %p78
    %p81 = scmp.ne.s32.totalorder %s64, %s80
    %p82 = scmp.eq.s32.totalorder %s18, 0
    %p83 = por %p81, %p82
    %s84 = ssub.s32 %s20, %s27
    %p85 = scmp.eq.s32.totalorder %s84, 0
    %s87 = sadd.s32 %s86, 1
    %s88 = scalar_select %p85, %s86, %s87
    %p91 = pneg %p85
    %p92 = scmp.eq.s32.totalorder %s12, 1
    %p93 = por %p91, %p92
    %p94 = scmp.ne.s32.totalorder %s86, %s89
    %p95 = scmp.eq.s32.totalorder %s12, 0
    %p96 = por %p94, %p95
    %p97 = scmp.ne.s32.totalorder %s86, %s89
    %p98 = scmp.eq.s32.totalorder %s17, 1
    %p99 = por %p97, %p98
    %p100 = scmp.ne.s32.totalorder %s89, %s90
    %p101 = scmp.eq.s32.totalorder %s17, 0
    %p102 = por %p100, %p101
    %p103 = scmp.ne.s32.totalorder %s89, %s90
    %p104 = scmp.eq.s32.totalorder %s18, 1
    %p105 = por %p103, %p104
    %p107 = scmp.ne.s32.totalorder %s90, %s106
    %p108 = scmp.eq.s32.totalorder %s18, 0
    %p109 = por %p107, %p108
    %s110 = ssub.s32 %s20, %s27
    %p111 = scmp.eq.s32.totalorder %s110, 0
    %s113 = sadd.s32 %s112, 1
    %s114 = scalar_select %p111, %s112, %s113
    %p117 = pneg %p111
    %p118 = scmp.eq.s32.totalorder %s12, 1
    %p119 = por %p117, %p118
    %p120 = scmp.ne.s32.totalorder %s112, %s115
    %p121 = scmp.eq.s32.totalorder %s12, 0
    %p122 = por %p120, %p121
    %p123 = scmp.ne.s32.totalorder %s112, %s115
    %p124 = scmp.eq.s32.totalorder %s17, 1
    %p125 = por %p123, %p124
    %p126 = scmp.ne.s32.totalorder %s115, %s116
    %p127 = scmp.eq.s32.totalorder %s17, 0
    %p128 = por %p126, %p127
    %p129 = scmp.ne.s32.totalorder %s115, %s116
    %p130 = scmp.eq.s32.totalorder %s18, 1
    %p131 = por %p129, %p130
    %p133 = scmp.ne.s32.totalorder %s116, %s132
    %p134 = scmp.eq.s32.totalorder %s18, 0
    %p135 = por %p133, %p134
    %s136 = ssub.s32 %s20, %s27
    %p137 = scmp.eq.s32.totalorder %s136, 0
    %s139 = sadd.s32 %s138, 1
    %s140 = scalar_select %p137, %s138, %s139
    %p143 = pneg %p137
    %p144 = scmp.eq.s32.totalorder %s12, 1
    %p145 = por %p143, %p144
    %p146 = scmp.ne.s32.totalorder %s138, %s141
    %p147 = scmp.eq.s32.totalorder %s12, 0
    %p148 = por %p146, %p147
    %p149 = scmp.ne.s32.totalorder %s138, %s141
    %p150 = scmp.eq.s32.totalorder %s17, 1
    %p151 = por %p149, %p150
    %p152 = scmp.ne.s32.totalorder %s141, %s142
    %p153 = scmp.eq.s32.totalorder %s17, 0
    %p154 = por %p152, %p153
    %p155 = scmp.ne.s32.totalorder %s141, %s142
    %p156 = scmp.eq.s32.totalorder %s18, 1
    %p157 = por %p155, %p156
    %p159 = scmp.ne.s32.totalorder %s142, %s158
    %p160 = scmp.eq.s32.totalorder %s18, 0
    %p161 = por %p159, %p160
    %s162 = ssub.s32 %s20, %s27
    %p163 = scmp.eq.s32.totalorder %s162, 0
    %s165 = sadd.s32 %s164, 1
    %s166 = scalar_select %p163, %s164, %s165
    %p169 = pneg %p163
    %p170 = scmp.eq.s32.totalorder %s12, 1
    %p171 = por %p169, %p170
    %p172 = scmp.ne.s32.totalorder %s164, %s167
    %p173 = scmp.eq.s32.totalorder %s12, 0
    %p174 = por %p172, %p173
    %p175 = scmp.ne.s32.totalorder %s164, %s167
    %p176 = scmp.eq.s32.totalorder %s17, 1
    %p177 = por %p175, %p176
    %p178 = scmp.ne.s32.totalorder %s167, %s168
    %p179 = scmp.eq.s32.totalorder %s17, 0
    %p180 = por %p178, %p179
    %p181 = scmp.ne.s32.totalorder %s167, %s168
    %p182 = scmp.eq.s32.totalorder %s18, 1
    %p183 = por %p181, %p182
    %p185 = scmp.ne.s32.totalorder %s168, %s184
    %p186 = scmp.eq.s32.totalorder %s18, 0
    %p187 = por %p185, %p186
    %s188 = ssub.s32 %s19, %s31
    %s189 = ssub.s32 %s20, %s27
    %s190 = sor.u32 %s188, %s189
    %p191 = scmp.eq.s32.totalorder %s190, 0
    %s193 = sadd.s32 %s192, 1
    %s194 = scalar_select %p191, %s192, %s193
    %p197 = pneg %p191
    %p198 = scmp.eq.s32.totalorder %s12, 1
    %p199 = por %p197, %p198
    %p200 = scmp.ne.s32.totalorder %s192, %s195
    %p201 = scmp.eq.s32.totalorder %s12, 0
    %p202 = por %p200, %p201
    %p203 = scmp.ne.s32.totalorder %s192, %s195
    %p204 = scmp.eq.s32.totalorder %s17, 1
    %p205 = por %p203, %p204
    %p206 = scmp.ne.s32.totalorder %s195, %s196
    %p207 = scmp.eq.s32.totalorder %s17, 0
    %p208 = por %p206, %p207
    %p209 = scmp.ne.s32.totalorder %s195, %s196
    %p210 = scmp.eq.s32.totalorder %s18, 1
    %p211 = por %p209, %p210
    %p213 = scmp.ne.s32.totalorder %s196, %s212
    %p214 = scmp.eq.s32.totalorder %s18, 0
    %p215 = por %p213, %p214
    %p216 = scmp.le.s32.totalorder 1, %s12
    %p217 = scmp.lt.s32.totalorder %s12, 3
    %p218 = pnand %p216, %p217
    %p219 = pneg %p218
    // Predicated region
    $region9: #{_downsample_impl.2} parent=5 // pred_check
      _
    $region10: #{_downsample_impl.2} parent=5 // pred_check_branch
      %221 = sbr.rel (%p218) target = $region12
    $region11: #{_downsample_impl.2} parent=5 // pred_region
      %s222 = ssub.s32 %s12, 1
      // Predicated region
      $region13: #{_downsample_impl.2} parent=11 // pred_check
        %p223 = pneg %p76
      $region14: #{_downsample_impl.2} parent=11 // pred_check_branch
        %225 = sbr.rel (%p223) target = $region16
      $region15: #{_downsample_impl.2} parent=11 // pred_region
        %p226 = scmp.lt.s32.totalorder %s22, 0
        %s227 = scalar_select %p226, %s22, 0
        %s228 = smul.addr %s227, 12
        %s229 = smul.addr %s228, 4
        %s230 = scalar_lea.vmem %s1, %s229
      $region16: #{_downsample_impl.2} parent=11 // pred_fallthru
        _
      // Predicated region
      $region17: #{_downsample_impl.2} parent=11 // pred_check
        %p231 = pneg %p102
      $region18: #{_downsample_impl.2} parent=11 // pred_check_branch
        %233 = sbr.rel (%p231) target = $region20
      $region19: #{_downsample_impl.2} parent=11 // pred_region
        %p234 = scmp.lt.s32.totalorder %s22, 0
        %s235 = scalar_select %p234, %s22, 0
        %s236 = smul.addr %s235, 4
        %s237 = smul.addr %s236, 8
        %s238 = scalar_lea.vmem %s2, %s237
      $region20: #{_downsample_impl.2} parent=11 // pred_fallthru
        _
      // Predicated region
      $region21: #{_downsample_impl.2} parent=11 // pred_check
        %p239 = pneg %p128
      $region22: #{_downsample_impl.2} parent=11 // pred_check_branch
        %241 = sbr.rel (%p239) target = $region24
      $region23: #{_downsample_impl.2} parent=11 // pred_region
        %p242 = scmp.lt.s32.totalorder %s22, 0
        %s243 = scalar_select %p242, %s22, 0
        %s244 = smul.addr %s243, 4
        %s245 = smul.addr %s244, 8
        %s246 = scalar_lea.vmem %s3, %s245
      $region24: #{_downsample_impl.2} parent=11 // pred_fallthru
        _
      // Predicated region
      $region25: #{_downsample_impl.2} parent=11 // pred_check
        %p247 = pneg %p154
      $region26: #{_downsample_impl.2} parent=11 // pred_check_branch
        %249 = sbr.rel (%p247) target = $region28
      $region27: #{_downsample_impl.2} parent=11 // pred_region
        %p250 = scmp.lt.s32.totalorder %s22, 0
        %s251 = scalar_select %p250, %s22, 0
        %s252 = smul.addr %s251, 4
        %s253 = smul.addr %s252, 8
        %s254 = scalar_lea.vmem %s4, %s253
      $region28: #{_downsample_impl.2} parent=11 // pred_fallthru
        _
      // Predicated region
      $region29: #{_downsample_impl.2} parent=11 // pred_check
        %p255 = pneg %p180
      $region30: #{_downsample_impl.2} parent=11 // pred_check_branch
        %257 = sbr.rel (%p255) target = $region32
      $region31: #{_downsample_impl.2} parent=11 // pred_region
        %p258 = scmp.lt.s32.totalorder %s22, 0
        %s259 = scalar_select %p258, %s22, 0
        %s260 = smul.addr %s259, 4
        %s261 = smul.addr %s260, 8
        %s262 = scalar_lea.vmem %s5, %s261
      $region32: #{_downsample_impl.2} parent=11 // pred_fallthru
        _
    $region12: #{_downsample_impl.2} parent=5 // pred_fallthru
      _
    %p263 = scmp.lt.s32.totalorder %s12, 2
    // Predicated region
    $region33: #{_downsample_impl.2} parent=5 // pred_check
      %p264 = pneg %p263
    $region34: #{_downsample_impl.2} parent=5 // pred_check_branch
      %266 = sbr.rel (%p264) target = $region36
    $region35: #{_downsample_impl.2} parent=5 // pred_region
      // Predicated region
      $region37: #{_downsample_impl.2} parent=35 // pred_check
        %p267 = pneg %p44
      $region38: #{_downsample_impl.2} parent=35 // pred_check_branch
        %269 = sbr.rel (%p267) target = $region40
      $region39: #{_downsample_impl.2} parent=35 // pred_region
        %p270 = scmp.lt.s32.totalorder %s19, 1
        %s271 = scalar_select %p270, %s19, 1
        %s272 = smul.addr %s271, 36
        %s273 = smul.addr %s272, 4
        %s274 = scalar_lea.vmem %s0, %s273
      $region40: #{_downsample_impl.2} parent=35 // pred_fallthru
        _
    $region36: #{_downsample_impl.2} parent=5 // pred_fallthru
      _
    %p275 = scmp.le.s32.totalorder 1, %s12
    %p276 = scmp.lt.s32.totalorder %s12, 3
    %p277 = pnand %p275, %p276
    %p278 = pneg %p277
    // Predicated region
    $region41: #{_downsample_impl.2} parent=5 // pred_check
      _
    $region42: #{_downsample_impl.2} parent=5 // pred_check_branch
      %280 = sbr.rel (%p277) target = $region44
    $region43: #{_downsample_impl.2} parent=5 // pred_region
      %s281 = ssub.s32 %s12, 1
      %p282 = scmp.lt.s32.totalorder %s21, 1
      %s283 = scalar_select %p282, %s21, 1
      %s284 = smul.addr %s283, 36
      %s285 = smul.addr %s284, 4
      %s286 = scalar_lea.vmem %s0, %s285
      %p287 = pneg %p50
      %p288 = pneg %p47
      %p289 = scmp.lt.s32.totalorder %s22, 0
      %s290 = scalar_select %p289, %s22, 0
      %s291 = smul.addr %s290, 12
      %s292 = smul.addr %s291, 4
      %s293 = scalar_lea.vmem %s1, %s292
      %p294 = pneg %p76
      %p295 = pneg %p73
      %p296 = scmp.lt.s32.totalorder %s22, 0
      %s297 = scalar_select %p296, %s22, 0
      %s298 = smul.addr %s297, 4
      %s299 = smul.addr %s298, 8
      %s300 = scalar_lea.vmem %s2, %s299
      %p301 = pneg %p102
      %p302 = pneg %p99
      %p303 = scmp.lt.s32.totalorder %s22, 0
      %s304 = scalar_select %p303, %s22, 0
      %s305 = smul.addr %s304, 4
      %s306 = smul.addr %s305, 8
      %s307 = scalar_lea.vmem %s3, %s306
      %p308 = pneg %p128
      %p309 = pneg %p125
      %p310 = scmp.lt.s32.totalorder %s22, 0
      %s311 = scalar_select %p310, %s22, 0
      %s312 = smul.addr %s311, 4
      %s313 = smul.addr %s312, 8
      %s314 = scalar_lea.vmem %s4, %s313
      %p315 = pneg %p154
      %p316 = pneg %p151
      %p317 = scmp.lt.s32.totalorder %s22, 0
      %s318 = scalar_select %p317, %s22, 0
      %s319 = smul.addr %s318, 4
      %s320 = smul.addr %s319, 8
      %s321 = scalar_lea.vmem %s5, %s320
      %p322 = pneg %p180
      %p323 = pneg %p177
      %p324 = pneg %p208
      %p325 = pneg %p205
      %s326 = smul.u32 4, %s22
      %p327 = scmp.lt.s32.totalorder %s21, 1
      %s328 = scalar_select %p327, %s21, 1
      %p329 = scmp.lt.s32.totalorder %s326, 3
      %s330 = scalar_select %p329, %s326, 3
      %s331 = smul.addr %s328, 4
      %s332 = sadd.s32 %s330, %s331
      %s333 = smul.addr %s332, 4
      %s334 = scalar_lea.vmem %s6, %s333
      %p335 = scmp.lt.s32.totalorder %s21, 1
      %s336 = scalar_select %p335, %s21, 1
      %s337 = smul.addr %s336, 36
      %s338 = smul.addr %s337, 4
      %s339 = scalar_lea.vmem %s0, %s338
      %p340 = scmp.lt.s32.totalorder %s22, 0
      %s341 = scalar_select %p340, %s22, 0
      %s342 = smul.addr %s341, 12
      %s343 = smul.addr %s342, 4
      %s344 = scalar_lea.vmem %s1, %s343
      %p345 = scmp.lt.s32.totalorder %s22, 0
      %s346 = scalar_select %p345, %s22, 0
      %s347 = smul.addr %s346, 4
      %s348 = smul.addr %s347, 8
      %s349 = scalar_lea.vmem %s2, %s348
      %p350 = scmp.lt.s32.totalorder %s22, 0
      %s351 = scalar_select %p350, %s22, 0
      %s352 = smul.addr %s351, 4
      %s353 = smul.addr %s352, 8
      %s354 = scalar_lea.vmem %s3, %s353
      %p355 = scmp.lt.s32.totalorder %s22, 0
      %s356 = scalar_select %p355, %s22, 0
      %s357 = smul.addr %s356, 4
      %s358 = smul.addr %s357, 8
      %s359 = scalar_lea.vmem %s4, %s358
      %p360 = scmp.lt.s32.totalorder %s22, 0
      %s361 = scalar_select %p360, %s22, 0
      %s362 = smul.addr %s361, 4
      %s363 = smul.addr %s362, 8
      %s364 = scalar_lea.vmem %s5, %s363
      %s365 = smul.u32 4, %s22
      %p366 = scmp.lt.s32.totalorder %s21, 1
      %s367 = scalar_select %p366, %s21, 1
      %p368 = scmp.lt.s32.totalorder %s365, 3
      %s369 = scalar_select %p368, %s365, 3
      %s370 = smul.addr %s367, 4
      %s371 = sadd.s32 %s369, %s370
      %s372 = smul.addr %s371, 4
      %s373 = scalar_lea.vmem %s6, %s372
      %s374 = smul.u32 4, %s22
      %v376 = vld [vmem:[%s344] sm:$0xff]
      %v377 = vld [vmem:[%s344 + $0x8] sm:$0xf]
      %v378 = vld [vmem:[%s344 + $0xc] sm:$0xff]
      %v379 = vld [vmem:[%s344 + $0x14] sm:$0xf]
      %v380 = vld [vmem:[%s344 + $0x18] sm:$0xff]
      %v381 = vld [vmem:[%s344 + $0x20] sm:$0xf]
      %v382 = vld [vmem:[%s344 + $0x24] sm:$0xff]
      %v383 = vld [vmem:[%s344 + $0x2c] sm:$0xf]
      %v384 = vld [vmem:[%s339] sm:$0xf]
      %v385 = vld [vmem:[%s339 + $0x4] sm:$0xf]
      %v386 = vld [vmem:[%s339 + $0x8] sm:$0xf]
      %v387 = vld [vmem:[%s339 + $0xc] sm:$0xf]
      %v388 = vld [vmem:[%s339 + $0x10] sm:$0xf]
      %v389 = vld [vmem:[%s339 + $0x14] sm:$0xf]
      %v390 = vld [vmem:[%s339 + $0x18] sm:$0xf]
      %v391 = vld [vmem:[%s339 + $0x1c] sm:$0xf]
      %v392 = vld [vmem:[%s339 + $0x20] sm:$0xf]
      %v393 = vld [vmem:[%s339 + $0x24] sm:$0xf]
      %v394 = vld [vmem:[%s339 + $0x28] sm:$0xf]
      %v395 = vld [vmem:[%s339 + $0x2c] sm:$0xf]
      %v396 = vld [vmem:[%s339 + $0x30] sm:$0xf]
      %v397 = vld [vmem:[%s339 + $0x34] sm:$0xf]
      %v398 = vld [vmem:[%s339 + $0x38] sm:$0xf]
      %v399 = vld [vmem:[%s339 + $0x3c] sm:$0xf]
      %v400 = vld [vmem:[%s339 + $0x40] sm:$0xf]
      %v401 = vld [vmem:[%s339 + $0x44] sm:$0xf]
      %v402 = vld [vmem:[%s339 + $0x48] sm:$0xf]
      %v403 = vld [vmem:[%s339 + $0x4c] sm:$0xf]
      %v404 = vld [vmem:[%s339 + $0x50] sm:$0xf]
      %v405 = vld [vmem:[%s339 + $0x54] sm:$0xf]
      %v406 = vld [vmem:[%s339 + $0x58] sm:$0xf]
      %v407 = vld [vmem:[%s339 + $0x5c] sm:$0xf]
      %v408 = vld [vmem:[%s339 + $0x60] sm:$0xf]
      %v409 = vld [vmem:[%s339 + $0x64] sm:$0xf]
      %v410 = vld [vmem:[%s339 + $0x68] sm:$0xf]
      %v411 = vld [vmem:[%s339 + $0x6c] sm:$0xf]
      %v412 = vld [vmem:[%s339 + $0x70] sm:$0xf]
      %v413 = vld [vmem:[%s339 + $0x74] sm:$0xf]
      %v414 = vld [vmem:[%s339 + $0x78] sm:$0xf]
      %v415 = vld [vmem:[%s339 + $0x7c] sm:$0xf]
      %v416 = vld [vmem:[%s339 + $0x80] sm:$0xf]
      %v417 = vld [vmem:[%s339 + $0x84] sm:$0xf]
      %v418 = vld [vmem:[%s339 + $0x88] sm:$0xf]
      %v419 = vld [vmem:[%s339 + $0x8c] sm:$0xf]
      %v428 = vunpack.c.l.b16 %v376
      %v429 = vunpack.c.h.b16 %v376
      %v430 = vunpack.c.l.b16 %v377
      %v431 = vunpack.c.l.b16 %v378
      %v432 = vunpack.c.h.b16 %v378
      %v433 = vunpack.c.l.b16 %v379
      %v434 = vunpack.c.l.b16 %v380
      %v435 = vunpack.c.h.b16 %v380
      %v436 = vunpack.c.l.b16 %v381
      %v437 = vunpack.c.l.b16 %v382
      %v438 = vunpack.c.h.b16 %v382
      %v439 = vunpack.c.l.b16 %v383
      %v440 = vpack.c.b16 %v431, %v428
      %v441 = vpack.c.b16 %v432, %v429
      %v442 = vpack.c.b16 %v433, %v430
      %v443 = vpack.c.b16 %v437, %v434
      %v444 = vpack.c.b16 %v438, %v435
      %v445 = vpack.c.b16 %v439, %v436
      %v486 = vunpack.c.l.b16 %v384
      %v487 = vunpack.c.l.b16 %v385
      %v488 = vunpack.c.l.b16 %v386
      %v489 = vunpack.c.l.b16 %v387
      %v490 = vunpack.c.l.b16 %v388
      %v491 = vunpack.c.l.b16 %v389
      %v492 = vunpack.c.l.b16 %v390
      %v493 = vunpack.c.l.b16 %v391
      %v494 = vunpack.c.l.b16 %v392
      %v495 = vunpack.c.l.b16 %v393
      %v496 = vunpack.c.l.b16 %v394
      %v497 = vunpack.c.l.b16 %v395
      %v498 = vunpack.c.l.b16 %v396
      %v499 = vunpack.c.l.b16 %v397
      %v500 = vunpack.c.l.b16 %v398
      %v501 = vunpack.c.l.b16 %v399
      %v502 = vunpack.c.l.b16 %v400
      %v503 = vunpack.c.l.b16 %v401
      %v504 = vunpack.c.l.b16 %v402
      %v505 = vunpack.c.l.b16 %v403
      %v506 = vunpack.c.l.b16 %v404
      %v507 = vunpack.c.l.b16 %v405
      %v508 = vunpack.c.l.b16 %v406
      %v509 = vunpack.c.l.b16 %v407
      %v510 = vunpack.c.l.b16 %v408
      %v511 = vunpack.c.l.b16 %v409
      %v512 = vunpack.c.l.b16 %v410
      %v513 = vunpack.c.l.b16 %v411
      %v514 = vunpack.c.l.b16 %v412
      %v515 = vunpack.c.l.b16 %v413
      %v516 = vunpack.c.l.b16 %v414
      %v517 = vunpack.c.l.b16 %v415
      %v518 = vunpack.c.l.b16 %v416
      %v519 = vunpack.c.l.b16 %v417
      %v520 = vunpack.c.l.b16 %v418
      %v521 = vunpack.c.l.b16 %v419
      %v522 = vpack.c.b16 %v487, %v486
      %v523 = vpack.c.b16 %v489, %v488
      %v524 = vpack.c.b16 %v491, %v490
      %v525 = vpack.c.b16 %v493, %v492
      %v526 = vpack.c.b16 %v495, %v494
      %v527 = vpack.c.b16 %v497, %v496
      %v528 = vpack.c.b16 %v499, %v498
      %v529 = vpack.c.b16 %v501, %v500
      %v530 = vpack.c.b16 %v503, %v502
      %v531 = vpack.c.b16 %v505, %v504
      %v532 = vpack.c.b16 %v507, %v506
      %v533 = vpack.c.b16 %v509, %v508
      %v534 = vpack.c.b16 %v511, %v510
      %v535 = vpack.c.b16 %v513, %v512
      %v536 = vpack.c.b16 %v515, %v514
      %v537 = vpack.c.b16 %v517, %v516
      %v538 = vpack.c.b16 %v519, %v518
      %v539 = vpack.c.b16 %v521, %v520
      %vm558 = vcmask 261120
      %v560 = vsel %vm558, %v442, 0
      %v563 = vsel %vm558, %v445, 0
      %565 = vmatpush.bf16.msra.mxu0 %v529
      %566 = vmatpush.bf16.msra.mxu0 %v528
      %567 = vmatpush.bf16.msra.mxu0 %v527
      %568 = vmatpush.bf16.msra.mxu0 %v526
      %569 = vmatpush.bf16.msra.mxu0 %v525
      %570 = vmatpush.bf16.msra.mxu0 %v524
      %571 = vmatpush.bf16.msra.mxu0 %v523
      %572 = vmatpush.bf16.msra.mxu0 %v522
      %573 = vmatmul.bf16.gmra.mxu0 %v440
      %v574 = vpop.f32.mrf.mxu0
      %v575 = vadd.f32 0.0, %v574
      %v576 = vpop.f32.mrf.mxu0
      %v577 = vadd.f32 0.0, %v576
      %578 = vmatmul.bf16.gmra.mxu0 %v443
      %v579 = vpop.f32.mrf.mxu0
      %v580 = vadd.f32 0.0, %v579
      %v581 = vpop.f32.mrf.mxu0
      %v582 = vadd.f32 0.0, %v581
      %583 = vdwg.mxu0
      %584 = vmatpush.bf16.msra.mxu0 %v537
      %585 = vmatpush.bf16.msra.mxu0 %v536
      %586 = vmatpush.bf16.msra.mxu0 %v535
      %587 = vmatpush.bf16.msra.mxu0 %v534
      %588 = vmatpush.bf16.msra.mxu0 %v533
      %589 = vmatpush.bf16.msra.mxu0 %v532
      %590 = vmatpush.bf16.msra.mxu0 %v531
      %591 = vmatpush.bf16.msra.mxu0 %v530
      %592 = vmatmul.bf16.gmra.mxu0 %v441
      %v593 = vpop.f32.mrf.mxu0
      %v594 = vadd.f32 %v575, %v593
      %v595 = vpop.f32.mrf.mxu0
      %v596 = vadd.f32 %v577, %v595
      %597 = vmatmul.bf16.gmra.mxu0 %v444
      %v598 = vpop.f32.mrf.mxu0
      %v599 = vadd.f32 %v580, %v598
      %v600 = vpop.f32.mrf.mxu0
      %v601 = vadd.f32 %v582, %v600
      %602 = vdwg.mxu0
      %603 = vmatpush.bf16.msra.mxu0 0
      %604 = vmatpush.bf16.msra.mxu0 0
      %605 = vmatpush.bf16.msra.mxu0 0
      %606 = vmatpush.bf16.msra.mxu0 0
      %607 = vmatpush.bf16.msra.mxu0 0
      %608 = vmatpush.bf16.msra.mxu0 0
      %609 = vmatpush.bf16.msra.mxu0 %v539
      %610 = vmatpush.bf16.msra.mxu0 %v538
      %611 = vmatmul.bf16.gmra.mxu0 %v560
      %v612 = vpop.f32.mrf.mxu0
      %v613 = vadd.f32 %v594, %v612
      %v614 = vpop.f32.mrf.mxu0
      %v615 = vadd.f32 %v596, %v614
      %616 = vmatmul.bf16.gmra.mxu0 %v563
      %v617 = vpop.f32.mrf.mxu0
      %v618 = vadd.f32 %v599, %v617
      %v619 = vpop.f32.mrf.mxu0
      %v620 = vadd.f32 %v601, %v619
      %621 = vdwg.mxu0
      %622 = vadd.xlane.f32.xlu0 %v613
      %v623 = vpop.xlane.xlu0 %622
      %624 = vadd.xlane.f32.xlu0 %v615
      %v625 = vpop.xlane.xlu0 %624
      %626 = vadd.xlane.f32.xlu0 %v618
      %v627 = vpop.xlane.xlu0 %626
      %628 = vadd.xlane.f32.xlu0 %v620
      %v629 = vpop.xlane.xlu0 %628
      %v630 = vmul.f32 %v613, %v613
      %v631 = vmul.f32 %v615, %v615
      %v632 = vmul.f32 %v618, %v618
      %v633 = vmul.f32 %v620, %v620
      %634 = vadd.xlane.f32.xlu0 %v630
      %v635 = vpop.xlane.xlu0 %634
      %636 = vadd.xlane.f32.xlu0 %v631
      %v637 = vpop.xlane.xlu0 %636
      %638 = vadd.xlane.f32.xlu0 %v632
      %v639 = vpop.xlane.xlu0 %638
      %640 = vadd.xlane.f32.xlu0 %v633
      %v641 = vpop.xlane.xlu0 %640
      %vm642 = vcmask 7168
      %v643 = vsel %vm642, %v623, %v635
      %v644 = vsel %vm642, %v625, %v637
      %v645 = vsel %vm642, %v627, %v639
      %v646 = vsel %vm642, %v629, %v641
      %v647 = vld [vmem:[%s349] sm:$0xff]
      %v648 = vld [vmem:[%s349 + $0x8] sm:$0xff]
      %v649 = vld [vmem:[%s349 + $0x10] sm:$0xff]
      %v650 = vld [vmem:[%s349 + $0x18] sm:$0xff]
      %v652 = vsel %vm558, %v647, 0
      %v655 = vsel %vm558, %v648, 0
      %v658 = vsel %vm558, %v649, 0
      %v661 = vsel %vm558, %v650, 0
      %663 = vmatpush.msra.mxu0 0.0
      %664 = vmatpush.msra.mxu0 0.0
      %665 = vmatpush.msra.mxu0 0.0
      %666 = vmatpush.msra.mxu0 0.0
      %667 = vmatpush.msra.mxu0 0.0
      %668 = vmatpush.msra.mxu0 0.0
      %669 = vmatpush.msra.mxu0 0.0
      %670 = vmatpush.msra.mxu0 0.0
      %671 = vmatpush.msra.mxu0 0.0
      %672 = vmatpush.msra.mxu0 0.0
      %673 = vmatpush.msra.mxu0 0.0
      %674 = vmatpush.msra.mxu0 0.0
      %675 = vmatpush.msra.mxu0 %v646
      %676 = vmatpush.msra.mxu0 %v645
      %677 = vmatpush.msra.mxu0 %v644
      %678 = vmatpush.msra.mxu0 %v643
      %679 = vmatmul.f32.gmra.mxu0 %v652
      %v680 = vpop.f32.mrf.mxu0
      %v681 = vadd.f32 0.0, %v680
      %682 = vmatmul.f32.gmra.mxu0 %v655
      %v683 = vpop.f32.mrf.mxu0
      %v684 = vadd.f32 0.0, %v683
      %685 = vmatmul.f32.gmra.mxu0 %v658
      %v686 = vpop.f32.mrf.mxu0
      %v687 = vadd.f32 0.0, %v686
      %688 = vmatmul.f32.gmra.mxu0 %v661
      %v689 = vpop.f32.mrf.mxu0
      %v690 = vadd.f32 0.0, %v689
      %691 = vdwg.mxu0
      %v692 = vmul.f32 %v681, %v681
      %v693 = vmul.f32 %v684, %v684
      %v694 = vmul.f32 %v687, %v687
      %v695 = vmul.f32 %v690, %v690
      %700 = vrot.lane.b32.xlu0 %v692, 1
      %v701 = vpop.permute.xlu0 %700
      %702 = vrot.lane.b32.xlu0 %v693, 1
      %v703 = vpop.permute.xlu0 %702
      %704 = vrot.lane.b32.xlu0 %v694, 1
      %v705 = vpop.permute.xlu0 %704
      %706 = vrot.lane.b32.xlu0 %v695, 1
      %v707 = vpop.permute.xlu0 %706
      %v712 = vsub.f32 %v681, %v701
      %v713 = vsub.f32 %v684, %v703
      %v714 = vsub.f32 %v687, %v705
      %v715 = vsub.f32 %v690, %v707
      %v716 = vmax.f32 %v712, 0.0
      %v717 = vmax.f32 %v713, 0.0
      %v718 = vmax.f32 %v714, 0.0
      %v719 = vmax.f32 %v715, 0.0
      %v720 = vadd.f32 %v716, 1e-05
      %v721 = vadd.f32 %v717, 1e-05
      %v722 = vadd.f32 %v718, 1e-05
      %v723 = vadd.f32 %v719, 1e-05
      %v724 = vrsqrt.pop %v720
      %v725 = vmul.f32 %v724, %v720
      %v726 = vmul.f32 %v725, %v724
      %v727 = vmul.f32 0.5, %v726
      %v728 = vsub.f32 1.5, %v727
      %v729 = vmul.f32 %v724, %v728
      %vm730 = vweird.f32 %v720
      %vm731 = vweird.f32 %v724
      %vm732 = vmor %vm730, %vm731
      %v733 = vsel %vm732, %v724, %v729
      %v734 = vrsqrt.pop %v721
      %v735 = vmul.f32 %v734, %v721
      %v736 = vmul.f32 %v735, %v734
      %v737 = vmul.f32 0.5, %v736
      %v738 = vsub.f32 1.5, %v737
      %v739 = vmul.f32 %v734, %v738
      %vm740 = vweird.f32 %v721
      %vm741 = vweird.f32 %v734
      %vm742 = vmor %vm740, %vm741
      %v743 = vsel %vm742, %v734, %v739
      %v744 = vrsqrt.pop %v722
      %v745 = vmul.f32 %v744, %v722
      %v746 = vmul.f32 %v745, %v744
      %v747 = vmul.f32 0.5, %v746
      %v748 = vsub.f32 1.5, %v747
      %v749 = vmul.f32 %v744, %v748
      %vm750 = vweird.f32 %v722
      %vm751 = vweird.f32 %v744
      %vm752 = vmor %vm750, %vm751
      %v753 = vsel %vm752, %v744, %v749
      %v754 = vrsqrt.pop %v723
      %v755 = vmul.f32 %v754, %v723
      %v756 = vmul.f32 %v755, %v754
      %v757 = vmul.f32 0.5, %v756
      %v758 = vsub.f32 1.5, %v757
      %v759 = vmul.f32 %v754, %v758
      %vm760 = vweird.f32 %v723
      %vm761 = vweird.f32 %v754
      %vm762 = vmor %vm760, %vm761
      %v763 = vsel %vm762, %v754, %v759
      %v764 = vld [vmem:[%s354] sm:$0xff]
      %v765 = vld [vmem:[%s354 + $0x8] sm:$0xff]
      %v766 = vld [vmem:[%s354 + $0x10] sm:$0xff]
      %v767 = vld [vmem:[%s354 + $0x18] sm:$0xff]
      %v768 = vsel %vm642, %v681, %v733
      %v769 = vsel %vm642, %v684, %v743
      %v770 = vsel %vm642, %v687, %v753
      %v771 = vsel %vm642, %v690, %v763
      %v773 = vsel %vm558, %v764, 0
      %v776 = vsel %vm558, %v765, 0
      %v779 = vsel %vm558, %v766, 0
      %v782 = vsel %vm558, %v767, 0
      %784 = vmatpush.msra.mxu0 0.0
      %785 = vmatpush.msra.mxu0 0.0
      %786 = vmatpush.msra.mxu0 0.0
      %787 = vmatpush.msra.mxu0 0.0
      %788 = vmatpush.msra.mxu0 0.0
      %789 = vmatpush.msra.mxu0 0.0
      %790 = vmatpush.msra.mxu0 0.0
      %791 = vmatpush.msra.mxu0 0.0
      %792 = vmatpush.msra.mxu0 0.0
      %793 = vmatpush.msra.mxu0 0.0
      %794 = vmatpush.msra.mxu0 0.0
      %795 = vmatpush.msra.mxu0 0.0
      %796 = vmatpush.msra.mxu0 %v771
      %797 = vmatpush.msra.mxu0 %v770
      %798 = vmatpush.msra.mxu0 %v769
      %799 = vmatpush.msra.mxu0 %v768
      %800 = vmatmul.f32.gmra.mxu0 %v773
      %v801 = vpop.f32.mrf.mxu0
      %v802 = vadd.f32 0.0, %v801
      %803 = vmatmul.f32.gmra.mxu0 %v776
      %v804 = vpop.f32.mrf.mxu0
      %v805 = vadd.f32 0.0, %v804
      %806 = vmatmul.f32.gmra.mxu0 %v779
      %v807 = vpop.f32.mrf.mxu0
      %v808 = vadd.f32 0.0, %v807
      %809 = vmatmul.f32.gmra.mxu0 %v782
      %v810 = vpop.f32.mrf.mxu0
      %v811 = vadd.f32 0.0, %v810
      %812 = vdwg.mxu0
      %v813 = vld [vmem:[%s359] sm:$0xff]
      %v814 = vld [vmem:[%s359 + $0x8] sm:$0xff]
      %v815 = vld [vmem:[%s359 + $0x10] sm:$0xff]
      %v816 = vld [vmem:[%s359 + $0x18] sm:$0xff]
      %821 = vrot.lane.b32.xlu0 %v813, 1
      %v822 = vpop.permute.xlu0 %821
      %823 = vrot.lane.b32.xlu0 %v814, 1
      %v824 = vpop.permute.xlu0 %823
      %825 = vrot.lane.b32.xlu0 %v815, 1
      %v826 = vpop.permute.xlu0 %825
      %827 = vrot.lane.b32.xlu0 %v816, 1
      %v828 = vpop.permute.xlu0 %827
      %v833 = vmul.f32 %v802, %v822
      %v834 = vmul.f32 %v805, %v824
      %v835 = vmul.f32 %v808, %v826
      %v836 = vmul.f32 %v811, %v828
      %v837 = vld [vmem:[%s364] sm:$0xff]
      %v838 = vld [vmem:[%s364 + $0x8] sm:$0xff]
      %v839 = vld [vmem:[%s364 + $0x10] sm:$0xff]
      %v840 = vld [vmem:[%s364 + $0x18] sm:$0xff]
      %845 = vrot.lane.b32.xlu0 %v833, 127
      %v846 = vpop.permute.xlu0 %845
      %847 = vrot.lane.b32.xlu0 %v834, 127
      %v848 = vpop.permute.xlu0 %847
      %849 = vrot.lane.b32.xlu0 %v835, 127
      %v850 = vpop.permute.xlu0 %849
      %851 = vrot.lane.b32.xlu0 %v836, 127
      %v852 = vpop.permute.xlu0 %851
      %v857 = vmul.f32 %v802, %v846
      %v858 = vmul.f32 %v805, %v848
      %v859 = vmul.f32 %v808, %v850
      %v860 = vmul.f32 %v811, %v852
      %v861 = vsub.f32 %v837, %v857
      %v862 = vsub.f32 %v838, %v858
      %v863 = vsub.f32 %v839, %v859
      %v864 = vsub.f32 %v840, %v860
      %865 = vset.pattern.permute.xlu0 1
      %866 = vperm.xlu0 %865, %v833
      %v867 = vpop.permute.xlu0 %866
      %869 = vset.pattern.permute.xlu0 1
      %870 = vperm.xlu0 %869, %v834
      %v871 = vpop.permute.xlu0 %870
      %873 = vset.pattern.permute.xlu0 1
      %874 = vperm.xlu0 %873, %v835
      %v875 = vpop.permute.xlu0 %874
      %877 = vset.pattern.permute.xlu0 1
      %878 = vperm.xlu0 %877, %v836
      %v879 = vpop.permute.xlu0 %878
      %v881 = vmul.f32 %v613, %v867
      %v882 = vmul.f32 %v615, %v871
      %v883 = vmul.f32 %v618, %v875
      %v884 = vmul.f32 %v620, %v879
      %886 = vset.pattern.permute.xlu0 0
      %887 = vperm.xlu0 %886, %v861
      %v888 = vpop.permute.xlu0 %887
      %891 = vset.pattern.permute.xlu0 0
      %892 = vperm.xlu0 %891, %v862
      %v893 = vpop.permute.xlu0 %892
      %896 = vset.pattern.permute.xlu0 0
      %897 = vperm.xlu0 %896, %v863
      %v898 = vpop.permute.xlu0 %897
      %901 = vset.pattern.permute.xlu0 0
      %902 = vperm.xlu0 %901, %v864
      %v903 = vpop.permute.xlu0 %902
      %v905 = vadd.f32 %v881, %v888
      %v906 = vadd.f32 %v882, %v893
      %v907 = vadd.f32 %v883, %v898
      %v908 = vadd.f32 %v884, %v903
      %v909 = vmul.f32 %v905, 0.5
      %v910 = vmul.f32 %v906, 0.5
      %v911 = vmul.f32 %v907, 0.5
      %v912 = vmul.f32 %v908, 0.5
      %v913 = vmul.f32 %v905, 0.70710677
      %v914 = vmul.f32 %v906, 0.70710677
      %v915 = vmul.f32 %v907, 0.70710677
      %v916 = vmul.f32 %v908, 0.70710677
      %vm917 = vcmp.ge.f32.partialorder %v913, 0.0
      %vm918 = vcmp.ge.f32.partialorder %v914, 0.0
      %vm919 = vcmp.ge.f32.partialorder %v915, 0.0
      %vm920 = vcmp.ge.f32.partialorder %v916, 0.0
      %v921 = vsel %vm917, 1.0, -1.0
      %v922 = vsel %vm918, 1.0, -1.0
      %v923 = vsel %vm919, 1.0, -1.0
      %v924 = vsel %vm920, 1.0, -1.0
      %v925 = vand.u32 2147483647, %v913
      %v926 = vand.u32 2147483647, %v914
      %v927 = vand.u32 2147483647, %v915
      %v928 = vand.u32 2147483647, %v916
      %v929 = vmul.f32 %v925, 0.3275911
      %v930 = vmul.f32 %v926, 0.3275911
      %v931 = vmul.f32 %v927, 0.3275911
      %v932 = vmul.f32 %v928, 0.3275911
      %v933 = vadd.f32 %v929, 1.0
      %v934 = vadd.f32 %v930, 1.0
      %v935 = vadd.f32 %v931, 1.0
      %v936 = vadd.f32 %v932, 1.0
      %v937 = vrcp.pop %v933
      %v938 = vrcp.pop %v934
      %v939 = vrcp.pop %v935
      %v940 = vrcp.pop %v936
      %v941 = vmul.f32 %v937, 1.0614054
      %v942 = vmul.f32 %v938, 1.0614054
      %v943 = vmul.f32 %v939, 1.0614054
      %v944 = vmul.f32 %v940, 1.0614054
      %v945 = vadd.f32 %v941, -1.4531521
      %v946 = vadd.f32 %v942, -1.4531521
      %v947 = vadd.f32 %v943, -1.4531521
      %v948 = vadd.f32 %v944, -1.4531521
      %v949 = vmul.f32 %v945, %v937
      %v950 = vmul.f32 %v946, %v938
      %v951 = vmul.f32 %v947, %v939
      %v952 = vmul.f32 %v948, %v940
      %v953 = vadd.f32 %v949, 1.4214138
      %v954 = vadd.f32 %v950, 1.4214138
      %v955 = vadd.f32 %v951, 1.4214138
      %v956 = vadd.f32 %v952, 1.4214138
      %v957 = vmul.f32 %v953, %v937
      %v958 = vmul.f32 %v954, %v938
      %v959 = vmul.f32 %v955, %v939
      %v960 = vmul.f32 %v956, %v940
      %v961 = vadd.f32 %v957, -0.28449672
      %v962 = vadd.f32 %v958, -0.28449672
      %v963 = vadd.f32 %v959, -0.28449672
      %v964 = vadd.f32 %v960, -0.28449672
      %v965 = vmul.f32 %v961, %v937
      %v966 = vmul.f32 %v962, %v938
      %v967 = vmul.f32 %v963, %v939
      %v968 = vmul.f32 %v964, %v940
      %v969 = vadd.f32 %v965, 0.2548296
      %v970 = vadd.f32 %v966, 0.2548296
      %v971 = vadd.f32 %v967, 0.2548296
      %v972 = vadd.f32 %v968, 0.2548296
      %v973 = vmul.f32 %v969, %v937
      %v974 = vmul.f32 %v970, %v938
      %v975 = vmul.f32 %v971, %v939
      %v976 = vmul.f32 %v972, %v940
      %v977 = vsub.f32 0.0, %v925
      %v978 = vsub.f32 0.0, %v926
      %v979 = vsub.f32 0.0, %v927
      %v980 = vsub.f32 0.0, %v928
      %v981 = vmul.f32 %v977, %v925
      %v982 = vmul.f32 %v978, %v926
      %v983 = vmul.f32 %v979, %v927
      %v984 = vmul.f32 %v980, %v928
      %v985 = vmul.f32 %v981, 1.442695
      %v986 = vpow.pop %v985
      %v987 = vmul.f32 %v982, 1.442695
      %v988 = vpow.pop %v987
      %v989 = vmul.f32 %v983, 1.442695
      %v990 = vpow.pop %v989
      %v991 = vmul.f32 %v984, 1.442695
      %v992 = vpow.pop %v991
      %v993 = vmul.f32 %v973, %v986
      %v994 = vmul.f32 %v974, %v988
      %v995 = vmul.f32 %v975, %v990
      %v996 = vmul.f32 %v976, %v992
      %v997 = vsub.f32 1.0, %v993
      %v998 = vsub.f32 1.0, %v994
      %v999 = vsub.f32 1.0, %v995
      %v1000 = vsub.f32 1.0, %v996
      %v1001 = vmul.f32 %v921, %v997
      %v1002 = vmul.f32 %v922, %v998
      %v1003 = vmul.f32 %v923, %v999
      %v1004 = vmul.f32 %v924, %v1000
      %v1005 = vadd.f32 %v1001, 1.0
      %v1006 = vadd.f32 %v1002, 1.0
      %v1007 = vadd.f32 %v1003, 1.0
      %v1008 = vadd.f32 %v1004, 1.0
      %v1009 = vmul.f32 %v909, %v1005
      %v1010 = vmul.f32 %v910, %v1006
      %v1011 = vmul.f32 %v911, %v1007
      %v1012 = vmul.f32 %v912, %v1008
      %v1013 = vpack.c.bf16 %v1009, %v1009
      %v1014 = vpack.c.bf16 %v1010, %v1010
      %v1015 = vpack.c.bf16 %v1011, %v1011
      %v1016 = vpack.c.bf16 %v1012, %v1012
      %1017 = vst [vmem:[%s373] sm:$0xf] %v1013
      %1018 = vst [vmem:[%s373 + $0x4] sm:$0xf] %v1014
      %1019 = vst [vmem:[%s373 + $0x8] sm:$0xf] %v1015
      %1020 = vst [vmem:[%s373 + $0xc] sm:$0xf] %v1016
      %s1021 = smul.u32 4, %s22
      %p1022 = scmp.lt.s32.totalorder %s21, 1
      %s1023 = scalar_select %p1022, %s21, 1
      %p1024 = scmp.lt.s32.totalorder %s1021, 3
      %s1025 = scalar_select %p1024, %s1021, 3
      %s1026 = smul.addr %s1023, 4
      %s1027 = sadd.s32 %s1025, %s1026
      %s1028 = smul.addr %s1027, 4
      %s1029 = scalar_lea.vmem %s6, %s1028
      // Predicated region
      $region45: #{_downsample_impl.2} parent=43 // pred_check
        %p1030 = pneg %p205
      $region46: #{_downsample_impl.2} parent=43 // pred_check_branch
        %1032 = sbr.rel (%p1030) target = $region48
      $region47: #{_downsample_impl.2} parent=43 // pred_region
        %s1033 = smul.u32 4, %s22
      $region48: #{_downsample_impl.2} parent=43 // pred_fallthru
        _
    $region44: #{_downsample_impl.2} parent=5 // pred_fallthru
      _
    %p1034 = scmp.le.s32.totalorder 2, %s12
    // Predicated region
    $region49: #{_downsample_impl.2} parent=5 // pred_check
      %p1035 = pneg %p1034
    $region50: #{_downsample_impl.2} parent=5 // pred_check_branch
      %1037 = sbr.rel (%p1035) target = $region52
    $region51: #{_downsample_impl.2} parent=5 // pred_region
      %s1038 = ssub.s32 %s12, 2
      // Predicated region
      $region53: #{_downsample_impl.2} parent=51 // pred_check
        %p1039 = pneg %p211
      $region54: #{_downsample_impl.2} parent=51 // pred_check_branch
        %1041 = sbr.rel (%p1039) target = $region56
      $region55: #{_downsample_impl.2} parent=51 // pred_region
        %s1042 = smul.u32 4, %s24
        %p1043 = scmp.lt.s32.totalorder %s23, 1
        %s1044 = scalar_select %p1043, %s23, 1
        %p1045 = scmp.lt.s32.totalorder %s1042, 3
        %s1046 = scalar_select %p1045, %s1042, 3
        %s1047 = smul.addr %s1044, 4
        %s1048 = sadd.s32 %s1046, %s1047
        %s1049 = smul.addr %s1048, 4
        %s1050 = scalar_lea.vmem %s6, %s1049
      $region56: #{_downsample_impl.2} parent=51 // pred_fallthru
        _
    $region52: #{_downsample_impl.2} parent=5 // pred_fallthru
      _
  $region6: #{_downsample_impl.2} parent=0 // loop_footer
    %s16 = sadd.s32 1, %s12
  $region7: #{_downsample_impl.2} parent=0 // loop_footer_branch
    %11 = sbr.rel target = $region3
  $region8: #{_downsample_impl.2} parent=0 // loop_exit
    _

// kernel: _downsample_impl.3
$region0: #{_downsample_impl.3}
  #allocation0 [shape = 'u32[]', space=smem, size = 0x4, offset = 0x4, fixed_abs, tag = 'smem constant byte address 0x4 - core index']
  #allocation1 [shape = 'u32[72,128]{1,0:T(1,128)}', space=vmem, size = 0x9000, scoped, tag = 'internal scratch']
  %s0 = inlined_call_operand.vmem [shape: bf16[2,288,128], index: 0, kind: input, shape index: {}]
  %s1 = inlined_call_operand.vmem [shape: bf16[1,32,288], index: 1, kind: input, shape index: {}]
  %s2 = inlined_call_operand.vmem [shape: f32[1,32,32], index: 2, kind: input, shape index: {}]
  %s3 = inlined_call_operand.vmem [shape: f32[1,32,32], index: 3, kind: input, shape index: {}]
  %s4 = inlined_call_operand.vmem [shape: f32[1,32,1], index: 4, kind: input, shape index: {}]
  %s5 = inlined_call_operand.vmem [shape: f32[1,32,1], index: 5, kind: input, shape index: {}]
  %s6 = inlined_call_operand.vmem [shape: f32[2,32,128], index: 6, kind: output, shape index: {}]
  %s7 = sld [smem:[#allocation0]]
  $region57: #{_downsample_impl.3} parent=0
    _
  %s9 = ssub.s32 1, %s7
  %s10 = scalar_select 0, %s9, %s7
  loop: start=0, step=1, limit=4
  $region2: #{_downsample_impl.3} parent=0 // loop_pre_header
    _
  $region3: #{_downsample_impl.3} parent=0 // loop_header
    %s12 = sphi 0, %s16
    %p13 = scmp.ge.s32.totalorder %s12, 4
    %s19 = sphi 0, %s31
    %s20 = sphi 0, %s27
    %s21 = sphi 0, %s19
    %s22 = sphi 0, %s20
    %s23 = sphi 0, %s21
    %s24 = sphi 0, %s22
    %s34 = sphi 0, %s36
    %s37 = sphi 0, %s34
    %s38 = sphi 0, %s37
    %s54 = sphi 0, %s38
    %s60 = sphi 0, %s62
    %s63 = sphi 0, %s60
    %s64 = sphi 0, %s63
    %s80 = sphi 0, %s64
    %s86 = sphi 0, %s88
    %s89 = sphi 0, %s86
    %s90 = sphi 0, %s89
    %s106 = sphi 0, %s90
    %s112 = sphi 0, %s114
    %s115 = sphi 0, %s112
    %s116 = sphi 0, %s115
    %s132 = sphi 0, %s116
    %s138 = sphi 0, %s140
    %s141 = sphi 0, %s138
    %s142 = sphi 0, %s141
    %s158 = sphi 0, %s142
    %s164 = sphi 0, %s166
    %s167 = sphi 0, %s164
    %s168 = sphi 0, %s167
    %s184 = sphi 0, %s168
    %s192 = sphi 0, %s194
    %s195 = sphi 0, %s192
    %s196 = sphi 0, %s195
    %s212 = sphi 0, %s196
  $region4: #{_downsample_impl.3} parent=0 // loop_header_branch
    %15 = sbr.rel (%p13) target = $region8
  $region5: #{_downsample_impl.3} parent=0 // loop_body
    %s17 = ssub.s32 %s12, 1
    %s18 = ssub.s32 %s12, 2
    %s25 = sadd.s32 1, %s20
    %p26 = scmp.ge.s32.totalorder %s25, 1
    %s27 = scalar_select %p26, 0, %s25
    %s28 = sadd.s32 1, %s19
    %s29 = scalar_select %p26, %s28, %s19
    %p30 = scmp.ge.s32.totalorder %s29, 2
    %s31 = scalar_select %p30, 0, %s29
    %s32 = ssub.s32 %s19, %s31
    %p33 = scmp.eq.s32.totalorder %s32, 0
    %s35 = sadd.s32 %s34, 1
    %s36 = scalar_select %p33, %s34, %s35
    %p39 = pneg %p33
    %p40 = scmp.eq.s32.totalorder %s12, 1
    %p41 = por %p39, %p40
    %p42 = scmp.ne.s32.totalorder %s34, %s37
    %p43 = scmp.eq.s32.totalorder %s12, 0
    %p44 = por %p42, %p43
    %p45 = scmp.ne.s32.totalorder %s34, %s37
    %p46 = scmp.eq.s32.totalorder %s17, 1
    %p47 = por %p45, %p46
    %p48 = scmp.ne.s32.totalorder %s37, %s38
    %p49 = scmp.eq.s32.totalorder %s17, 0
    %p50 = por %p48, %p49
    %p51 = scmp.ne.s32.totalorder %s37, %s38
    %p52 = scmp.eq.s32.totalorder %s18, 1
    %p53 = por %p51, %p52
    %p55 = scmp.ne.s32.totalorder %s38, %s54
    %p56 = scmp.eq.s32.totalorder %s18, 0
    %p57 = por %p55, %p56
    %s58 = ssub.s32 %s20, %s27
    %p59 = scmp.eq.s32.totalorder %s58, 0
    %s61 = sadd.s32 %s60, 1
    %s62 = scalar_select %p59, %s60, %s61
    %p65 = pneg %p59
    %p66 = scmp.eq.s32.totalorder %s12, 1
    %p67 = por %p65, %p66
    %p68 = scmp.ne.s32.totalorder %s60, %s63
    %p69 = scmp.eq.s32.totalorder %s12, 0
    %p70 = por %p68, %p69
    %p71 = scmp.ne.s32.totalorder %s60, %s63
    %p72 = scmp.eq.s32.totalorder %s17, 1
    %p73 = por %p71, %p72
    %p74 = scmp.ne.s32.totalorder %s63, %s64
    %p75 = scmp.eq.s32.totalorder %s17, 0
    %p76 = por %p74, %p75
    %p77 = scmp.ne.s32.totalorder %s63, %s64
    %p78 = scmp.eq.s32.totalorder %s18, 1
    %p79 = por %p77, %p78
    %p81 = scmp.ne.s32.totalorder %s64, %s80
    %p82 = scmp.eq.s32.totalorder %s18, 0
    %p83 = por %p81, %p82
    %s84 = ssub.s32 %s20, %s27
    %p85 = scmp.eq.s32.totalorder %s84, 0
    %s87 = sadd.s32 %s86, 1
    %s88 = scalar_select %p85, %s86, %s87
    %p91 = pneg %p85
    %p92 = scmp.eq.s32.totalorder %s12, 1
    %p93 = por %p91, %p92
    %p94 = scmp.ne.s32.totalorder %s86, %s89
    %p95 = scmp.eq.s32.totalorder %s12, 0
    %p96 = por %p94, %p95
    %p97 = scmp.ne.s32.totalorder %s86, %s89
    %p98 = scmp.eq.s32.totalorder %s17, 1
    %p99 = por %p97, %p98
    %p100 = scmp.ne.s32.totalorder %s89, %s90
    %p101 = scmp.eq.s32.totalorder %s17, 0
    %p102 = por %p100, %p101
    %p103 = scmp.ne.s32.totalorder %s89, %s90
    %p104 = scmp.eq.s32.totalorder %s18, 1
    %p105 = por %p103, %p104
    %p107 = scmp.ne.s32.totalorder %s90, %s106
    %p108 = scmp.eq.s32.totalorder %s18, 0
    %p109 = por %p107, %p108
    %s110 = ssub.s32 %s20, %s27
    %p111 = scmp.eq.s32.totalorder %s110, 0
    %s113 = sadd.s32 %s112, 1
    %s114 = scalar_select %p111, %s112, %s113
    %p117 = pneg %p111
    %p118 = scmp.eq.s32.totalorder %s12, 1
    %p119 = por %p117, %p118
    %p120 = scmp.ne.s32.totalorder %s112, %s115
    %p121 = scmp.eq.s32.totalorder %s12, 0
    %p122 = por %p120, %p121
    %p123 = scmp.ne.s32.totalorder %s112, %s115
    %p124 = scmp.eq.s32.totalorder %s17, 1
    %p125 = por %p123, %p124
    %p126 = scmp.ne.s32.totalorder %s115, %s116
    %p127 = scmp.eq.s32.totalorder %s17, 0
    %p128 = por %p126, %p127
    %p129 = scmp.ne.s32.totalorder %s115, %s116
    %p130 = scmp.eq.s32.totalorder %s18, 1
    %p131 = por %p129, %p130
    %p133 = scmp.ne.s32.totalorder %s116, %s132
    %p134 = scmp.eq.s32.totalorder %s18, 0
    %p135 = por %p133, %p134
    %s136 = ssub.s32 %s20, %s27
    %p137 = scmp.eq.s32.totalorder %s136, 0
    %s139 = sadd.s32 %s138, 1
    %s140 = scalar_select %p137, %s138, %s139
    %p143 = pneg %p137
    %p144 = scmp.eq.s32.totalorder %s12, 1
    %p145 = por %p143, %p144
    %p146 = scmp.ne.s32.totalorder %s138, %s141
    %p147 = scmp.eq.s32.totalorder %s12, 0
    %p148 = por %p146, %p147
    %p149 = scmp.ne.s32.totalorder %s138, %s141
    %p150 = scmp.eq.s32.totalorder %s17, 1
    %p151 = por %p149, %p150
    %p152 = scmp.ne.s32.totalorder %s141, %s142
    %p153 = scmp.eq.s32.totalorder %s17, 0
    %p154 = por %p152, %p153
    %p155 = scmp.ne.s32.totalorder %s141, %s142
    %p156 = scmp.eq.s32.totalorder %s18, 1
    %p157 = por %p155, %p156
    %p159 = scmp.ne.s32.totalorder %s142, %s158
    %p160 = scmp.eq.s32.totalorder %s18, 0
    %p161 = por %p159, %p160
    %s162 = ssub.s32 %s20, %s27
    %p163 = scmp.eq.s32.totalorder %s162, 0
    %s165 = sadd.s32 %s164, 1
    %s166 = scalar_select %p163, %s164, %s165
    %p169 = pneg %p163
    %p170 = scmp.eq.s32.totalorder %s12, 1
    %p171 = por %p169, %p170
    %p172 = scmp.ne.s32.totalorder %s164, %s167
    %p173 = scmp.eq.s32.totalorder %s12, 0
    %p174 = por %p172, %p173
    %p175 = scmp.ne.s32.totalorder %s164, %s167
    %p176 = scmp.eq.s32.totalorder %s17, 1
    %p177 = por %p175, %p176
    %p178 = scmp.ne.s32.totalorder %s167, %s168
    %p179 = scmp.eq.s32.totalorder %s17, 0
    %p180 = por %p178, %p179
    %p181 = scmp.ne.s32.totalorder %s167, %s168
    %p182 = scmp.eq.s32.totalorder %s18, 1
    %p183 = por %p181, %p182
    %p185 = scmp.ne.s32.totalorder %s168, %s184
    %p186 = scmp.eq.s32.totalorder %s18, 0
    %p187 = por %p185, %p186
    %s188 = ssub.s32 %s19, %s31
    %s189 = ssub.s32 %s20, %s27
    %s190 = sor.u32 %s188, %s189
    %p191 = scmp.eq.s32.totalorder %s190, 0
    %s193 = sadd.s32 %s192, 1
    %s194 = scalar_select %p191, %s192, %s193
    %p197 = pneg %p191
    %p198 = scmp.eq.s32.totalorder %s12, 1
    %p199 = por %p197, %p198
    %p200 = scmp.ne.s32.totalorder %s192, %s195
    %p201 = scmp.eq.s32.totalorder %s12, 0
    %p202 = por %p200, %p201
    %p203 = scmp.ne.s32.totalorder %s192, %s195
    %p204 = scmp.eq.s32.totalorder %s17, 1
    %p205 = por %p203, %p204
    %p206 = scmp.ne.s32.totalorder %s195, %s196
    %p207 = scmp.eq.s32.totalorder %s17, 0
    %p208 = por %p206, %p207
    %p209 = scmp.ne.s32.totalorder %s195, %s196
    %p210 = scmp.eq.s32.totalorder %s18, 1
    %p211 = por %p209, %p210
    %p213 = scmp.ne.s32.totalorder %s196, %s212
    %p214 = scmp.eq.s32.totalorder %s18, 0
    %p215 = por %p213, %p214
    %p216 = scmp.le.s32.totalorder 1, %s12
    %p217 = scmp.lt.s32.totalorder %s12, 3
    %p218 = pnand %p216, %p217
    %p219 = pneg %p218
    // Predicated region
    $region9: #{_downsample_impl.3} parent=5 // pred_check
      _
    $region10: #{_downsample_impl.3} parent=5 // pred_check_branch
      %221 = sbr.rel (%p218) target = $region12
    $region11: #{_downsample_impl.3} parent=5 // pred_region
      %s222 = ssub.s32 %s12, 1
      // Predicated region
      $region13: #{_downsample_impl.3} parent=11 // pred_check
        %p223 = pneg %p76
      $region14: #{_downsample_impl.3} parent=11 // pred_check_branch
        %225 = sbr.rel (%p223) target = $region16
      $region15: #{_downsample_impl.3} parent=11 // pred_region
        %p226 = scmp.lt.s32.totalorder %s22, 0
        %s227 = scalar_select %p226, %s22, 0
        %s228 = smul.addr %s227, 12
        %s229 = smul.addr %s228, 4
        %s230 = scalar_lea.vmem %s1, %s229
      $region16: #{_downsample_impl.3} parent=11 // pred_fallthru
        _
      // Predicated region
      $region17: #{_downsample_impl.3} parent=11 // pred_check
        %p231 = pneg %p102
      $region18: #{_downsample_impl.3} parent=11 // pred_check_branch
        %233 = sbr.rel (%p231) target = $region20
      $region19: #{_downsample_impl.3} parent=11 // pred_region
        %p234 = scmp.lt.s32.totalorder %s22, 0
        %s235 = scalar_select %p234, %s22, 0
        %s236 = smul.addr %s235, 4
        %s237 = smul.addr %s236, 8
        %s238 = scalar_lea.vmem %s2, %s237
      $region20: #{_downsample_impl.3} parent=11 // pred_fallthru
        _
      // Predicated region
      $region21: #{_downsample_impl.3} parent=11 // pred_check
        %p239 = pneg %p128
      $region22: #{_downsample_impl.3} parent=11 // pred_check_branch
        %241 = sbr.rel (%p239) target = $region24
      $region23: #{_downsample_impl.3} parent=11 // pred_region
        %p242 = scmp.lt.s32.totalorder %s22, 0
        %s243 = scalar_select %p242, %s22, 0
        %s244 = smul.addr %s243, 4
        %s245 = smul.addr %s244, 8
        %s246 = scalar_lea.vmem %s3, %s245
      $region24: #{_downsample_impl.3} parent=11 // pred_fallthru
        _
      // Predicated region
      $region25: #{_downsample_impl.3} parent=11 // pred_check
        %p247 = pneg %p154
      $region26: #{_downsample_impl.3} parent=11 // pred_check_branch
        %249 = sbr.rel (%p247) target = $region28
      $region27: #{_downsample_impl.3} parent=11 // pred_region
        %p250 = scmp.lt.s32.totalorder %s22, 0
        %s251 = scalar_select %p250, %s22, 0
        %s252 = smul.addr %s251, 4
        %s253 = smul.addr %s252, 8
        %s254 = scalar_lea.vmem %s4, %s253
      $region28: #{_downsample_impl.3} parent=11 // pred_fallthru
        _
      // Predicated region
      $region29: #{_downsample_impl.3} parent=11 // pred_check
        %p255 = pneg %p180
      $region30: #{_downsample_impl.3} parent=11 // pred_check_branch
        %257 = sbr.rel (%p255) target = $region32
      $region31: #{_downsample_impl.3} parent=11 // pred_region
        %p258 = scmp.lt.s32.totalorder %s22, 0
        %s259 = scalar_select %p258, %s22, 0
        %s260 = smul.addr %s259, 4
        %s261 = smul.addr %s260, 8
        %s262 = scalar_lea.vmem %s5, %s261
      $region32: #{_downsample_impl.3} parent=11 // pred_fallthru
        _
    $region12: #{_downsample_impl.3} parent=5 // pred_fallthru
      _
    %p263 = scmp.lt.s32.totalorder %s12, 2
    // Predicated region
    $region33: #{_downsample_impl.3} parent=5 // pred_check
      %p264 = pneg %p263
    $region34: #{_downsample_impl.3} parent=5 // pred_check_branch
      %266 = sbr.rel (%p264) target = $region36
    $region35: #{_downsample_impl.3} parent=5 // pred_region
      // Predicated region
      $region37: #{_downsample_impl.3} parent=35 // pred_check
        %p267 = pneg %p44
      $region38: #{_downsample_impl.3} parent=35 // pred_check_branch
        %269 = sbr.rel (%p267) target = $region40
      $region39: #{_downsample_impl.3} parent=35 // pred_region
        %p270 = scmp.lt.s32.totalorder %s19, 1
        %s271 = scalar_select %p270, %s19, 1
        %s272 = smul.addr %s271, 36
        %s273 = smul.addr %s272, 4
        %s274 = scalar_lea.vmem %s0, %s273
      $region40: #{_downsample_impl.3} parent=35 // pred_fallthru
        _
    $region36: #{_downsample_impl.3} parent=5 // pred_fallthru
      _
    %p275 = scmp.le.s32.totalorder 1, %s12
    %p276 = scmp.lt.s32.totalorder %s12, 3
    %p277 = pnand %p275, %p276
    %p278 = pneg %p277
    // Predicated region
    $region41: #{_downsample_impl.3} parent=5 // pred_check
      _
    $region42: #{_downsample_impl.3} parent=5 // pred_check_branch
      %280 = sbr.rel (%p277) target = $region44
    $region43: #{_downsample_impl.3} parent=5 // pred_region
      %s281 = ssub.s32 %s12, 1
      %p282 = scmp.lt.s32.totalorder %s21, 1
      %s283 = scalar_select %p282, %s21, 1
      %s284 = smul.addr %s283, 36
      %s285 = smul.addr %s284, 4
      %s286 = scalar_lea.vmem %s0, %s285
      %p287 = pneg %p50
      %p288 = pneg %p47
      %p289 = scmp.lt.s32.totalorder %s22, 0
      %s290 = scalar_select %p289, %s22, 0
      %s291 = smul.addr %s290, 12
      %s292 = smul.addr %s291, 4
      %s293 = scalar_lea.vmem %s1, %s292
      %p294 = pneg %p76
      %p295 = pneg %p73
      %p296 = scmp.lt.s32.totalorder %s22, 0
      %s297 = scalar_select %p296, %s22, 0
      %s298 = smul.addr %s297, 4
      %s299 = smul.addr %s298, 8
      %s300 = scalar_lea.vmem %s2, %s299
      %p301 = pneg %p102
      %p302 = pneg %p99
      %p303 = scmp.lt.s32.totalorder %s22, 0
      %s304 = scalar_select %p303, %s22, 0
      %s305 = smul.addr %s304, 4
      %s306 = smul.addr %s305, 8
      %s307 = scalar_lea.vmem %s3, %s306
      %p308 = pneg %p128
      %p309 = pneg %p125
      %p310 = scmp.lt.s32.totalorder %s22, 0
      %s311 = scalar_select %p310, %s22, 0
      %s312 = smul.addr %s311, 4
      %s313 = smul.addr %s312, 8
      %s314 = scalar_lea.vmem %s4, %s313
      %p315 = pneg %p154
      %p316 = pneg %p151
      %p317 = scmp.lt.s32.totalorder %s22, 0
      %s318 = scalar_select %p317, %s22, 0
      %s319 = smul.addr %s318, 4
      %s320 = smul.addr %s319, 8
      %s321 = scalar_lea.vmem %s5, %s320
      %p322 = pneg %p180
      %p323 = pneg %p177
      %p324 = pneg %p208
      %p325 = pneg %p205
      %s326 = smul.u32 4, %s22
      %p327 = scmp.lt.s32.totalorder %s21, 1
      %s328 = scalar_select %p327, %s21, 1
      %p329 = scmp.lt.s32.totalorder %s326, 3
      %s330 = scalar_select %p329, %s326, 3
      %s331 = smul.addr %s328, 4
      %s332 = sadd.s32 %s330, %s331
      %s333 = smul.addr %s332, 8
      %s334 = scalar_lea.vmem %s6, %s333
      %p335 = scmp.lt.s32.totalorder %s21, 1
      %s336 = scalar_select %p335, %s21, 1
      %s337 = smul.addr %s336, 36
      %s338 = smul.addr %s337, 4
      %s339 = scalar_lea.vmem %s0, %s338
      %p340 = scmp.lt.s32.totalorder %s22, 0
      %s341 = scalar_select %p340, %s22, 0
      %s342 = smul.addr %s341, 12
      %s343 = smul.addr %s342, 4
      %s344 = scalar_lea.vmem %s1, %s343
      %p345 = scmp.lt.s32.totalorder %s22, 0
      %s346 = scalar_select %p345, %s22, 0
      %s347 = smul.addr %s346, 4
      %s348 = smul.addr %s347, 8
      %s349 = scalar_lea.vmem %s2, %s348
      %p350 = scmp.lt.s32.totalorder %s22, 0
      %s351 = scalar_select %p350, %s22, 0
      %s352 = smul.addr %s351, 4
      %s353 = smul.addr %s352, 8
      %s354 = scalar_lea.vmem %s3, %s353
      %p355 = scmp.lt.s32.totalorder %s22, 0
      %s356 = scalar_select %p355, %s22, 0
      %s357 = smul.addr %s356, 4
      %s358 = smul.addr %s357, 8
      %s359 = scalar_lea.vmem %s4, %s358
      %p360 = scmp.lt.s32.totalorder %s22, 0
      %s361 = scalar_select %p360, %s22, 0
      %s362 = smul.addr %s361, 4
      %s363 = smul.addr %s362, 8
      %s364 = scalar_lea.vmem %s5, %s363
      %s365 = smul.u32 4, %s22
      %p366 = scmp.lt.s32.totalorder %s21, 1
      %s367 = scalar_select %p366, %s21, 1
      %p368 = scmp.lt.s32.totalorder %s365, 3
      %s369 = scalar_select %p368, %s365, 3
      %s370 = smul.addr %s367, 4
      %s371 = sadd.s32 %s369, %s370
      %s372 = smul.addr %s371, 8
      %s373 = scalar_lea.vmem %s6, %s372
      %s374 = smul.u32 4, %s22
      %v376 = vld [vmem:[%s344] sm:$0xff]
      %v377 = vld [vmem:[%s344 + $0x8] sm:$0xf]
      %v378 = vld [vmem:[%s344 + $0xc] sm:$0xff]
      %v379 = vld [vmem:[%s344 + $0x14] sm:$0xf]
      %v380 = vld [vmem:[%s344 + $0x18] sm:$0xff]
      %v381 = vld [vmem:[%s344 + $0x20] sm:$0xf]
      %v382 = vld [vmem:[%s344 + $0x24] sm:$0xff]
      %v383 = vld [vmem:[%s344 + $0x2c] sm:$0xf]
      %v384 = vld [vmem:[%s339] sm:$0xf]
      %v385 = vld [vmem:[%s339 + $0x4] sm:$0xf]
      %v386 = vld [vmem:[%s339 + $0x8] sm:$0xf]
      %v387 = vld [vmem:[%s339 + $0xc] sm:$0xf]
      %v388 = vld [vmem:[%s339 + $0x10] sm:$0xf]
      %v389 = vld [vmem:[%s339 + $0x14] sm:$0xf]
      %v390 = vld [vmem:[%s339 + $0x18] sm:$0xf]
      %v391 = vld [vmem:[%s339 + $0x1c] sm:$0xf]
      %v392 = vld [vmem:[%s339 + $0x20] sm:$0xf]
      %v393 = vld [vmem:[%s339 + $0x24] sm:$0xf]
      %v394 = vld [vmem:[%s339 + $0x28] sm:$0xf]
      %v395 = vld [vmem:[%s339 + $0x2c] sm:$0xf]
      %v396 = vld [vmem:[%s339 + $0x30] sm:$0xf]
      %v397 = vld [vmem:[%s339 + $0x34] sm:$0xf]
      %v398 = vld [vmem:[%s339 + $0x38] sm:$0xf]
      %v399 = vld [vmem:[%s339 + $0x3c] sm:$0xf]
      %v400 = vld [vmem:[%s339 + $0x40] sm:$0xf]
      %v401 = vld [vmem:[%s339 + $0x44] sm:$0xf]
      %v402 = vld [vmem:[%s339 + $0x48] sm:$0xf]
      %v403 = vld [vmem:[%s339 + $0x4c] sm:$0xf]
      %v404 = vld [vmem:[%s339 + $0x50] sm:$0xf]
      %v405 = vld [vmem:[%s339 + $0x54] sm:$0xf]
      %v406 = vld [vmem:[%s339 + $0x58] sm:$0xf]
      %v407 = vld [vmem:[%s339 + $0x5c] sm:$0xf]
      %v408 = vld [vmem:[%s339 + $0x60] sm:$0xf]
      %v409 = vld [vmem:[%s339 + $0x64] sm:$0xf]
      %v410 = vld [vmem:[%s339 + $0x68] sm:$0xf]
      %v411 = vld [vmem:[%s339 + $0x6c] sm:$0xf]
      %v412 = vld [vmem:[%s339 + $0x70] sm:$0xf]
      %v413 = vld [vmem:[%s339 + $0x74] sm:$0xf]
      %v414 = vld [vmem:[%s339 + $0x78] sm:$0xf]
      %v415 = vld [vmem:[%s339 + $0x7c] sm:$0xf]
      %v416 = vld [vmem:[%s339 + $0x80] sm:$0xf]
      %v417 = vld [vmem:[%s339 + $0x84] sm:$0xf]
      %v418 = vld [vmem:[%s339 + $0x88] sm:$0xf]
      %v419 = vld [vmem:[%s339 + $0x8c] sm:$0xf]
      %v428 = vunpack.c.l.b16 %v376
      %v429 = vunpack.c.h.b16 %v376
      %v430 = vunpack.c.l.b16 %v377
      %v431 = vunpack.c.l.b16 %v378
      %v432 = vunpack.c.h.b16 %v378
      %v433 = vunpack.c.l.b16 %v379
      %v434 = vunpack.c.l.b16 %v380
      %v435 = vunpack.c.h.b16 %v380
      %v436 = vunpack.c.l.b16 %v381
      %v437 = vunpack.c.l.b16 %v382
      %v438 = vunpack.c.h.b16 %v382
      %v439 = vunpack.c.l.b16 %v383
      %v440 = vpack.c.b16 %v431, %v428
      %v441 = vpack.c.b16 %v432, %v429
      %v442 = vpack.c.b16 %v433, %v430
      %v443 = vpack.c.b16 %v437, %v434
      %v444 = vpack.c.b16 %v438, %v435
      %v445 = vpack.c.b16 %v439, %v436
      %v486 = vunpack.c.l.b16 %v384
      %v487 = vunpack.c.l.b16 %v385
      %v488 = vunpack.c.l.b16 %v386
      %v489 = vunpack.c.l.b16 %v387
      %v490 = vunpack.c.l.b16 %v388
      %v491 = vunpack.c.l.b16 %v389
      %v492 = vunpack.c.l.b16 %v390
      %v493 = vunpack.c.l.b16 %v391
      %v494 = vunpack.c.l.b16 %v392
      %v495 = vunpack.c.l.b16 %v393
      %v496 = vunpack.c.l.b16 %v394
      %v497 = vunpack.c.l.b16 %v395
      %v498 = vunpack.c.l.b16 %v396
      %v499 = vunpack.c.l.b16 %v397
      %v500 = vunpack.c.l.b16 %v398
      %v501 = vunpack.c.l.b16 %v399
      %v502 = vunpack.c.l.b16 %v400
      %v503 = vunpack.c.l.b16 %v401
      %v504 = vunpack.c.l.b16 %v402
      %v505 = vunpack.c.l.b16 %v403
      %v506 = vunpack.c.l.b16 %v404
      %v507 = vunpack.c.l.b16 %v405
      %v508 = vunpack.c.l.b16 %v406
      %v509 = vunpack.c.l.b16 %v407
      %v510 = vunpack.c.l.b16 %v408
      %v511 = vunpack.c.l.b16 %v409
      %v512 = vunpack.c.l.b16 %v410
      %v513 = vunpack.c.l.b16 %v411
      %v514 = vunpack.c.l.b16 %v412
      %v515 = vunpack.c.l.b16 %v413
      %v516 = vunpack.c.l.b16 %v414
      %v517 = vunpack.c.l.b16 %v415
      %v518 = vunpack.c.l.b16 %v416
      %v519 = vunpack.c.l.b16 %v417
      %v520 = vunpack.c.l.b16 %v418
      %v521 = vunpack.c.l.b16 %v419
      %v522 = vpack.c.b16 %v487, %v486
      %v523 = vpack.c.b16 %v489, %v488
      %v524 = vpack.c.b16 %v491, %v490
      %v525 = vpack.c.b16 %v493, %v492
      %v526 = vpack.c.b16 %v495, %v494
      %v527 = vpack.c.b16 %v497, %v496
      %v528 = vpack.c.b16 %v499, %v498
      %v529 = vpack.c.b16 %v501, %v500
      %v530 = vpack.c.b16 %v503, %v502
      %v531 = vpack.c.b16 %v505, %v504
      %v532 = vpack.c.b16 %v507, %v506
      %v533 = vpack.c.b16 %v509, %v508
      %v534 = vpack.c.b16 %v511, %v510
      %v535 = vpack.c.b16 %v513, %v512
      %v536 = vpack.c.b16 %v515, %v514
      %v537 = vpack.c.b16 %v517, %v516
      %v538 = vpack.c.b16 %v519, %v518
      %v539 = vpack.c.b16 %v521, %v520
      %vm558 = vcmask 261120
      %v560 = vsel %vm558, %v442, 0
      %v563 = vsel %vm558, %v445, 0
      %565 = vmatpush.bf16.msra.mxu0 %v529
      %566 = vmatpush.bf16.msra.mxu0 %v528
      %567 = vmatpush.bf16.msra.mxu0 %v527
      %568 = vmatpush.bf16.msra.mxu0 %v526
      %569 = vmatpush.bf16.msra.mxu0 %v525
      %570 = vmatpush.bf16.msra.mxu0 %v524
      %571 = vmatpush.bf16.msra.mxu0 %v523
      %572 = vmatpush.bf16.msra.mxu0 %v522
      %573 = vmatmul.bf16.gmra.mxu0 %v440
      %v574 = vpop.f32.mrf.mxu0
      %v575 = vadd.f32 0.0, %v574
      %v576 = vpop.f32.mrf.mxu0
      %v577 = vadd.f32 0.0, %v576
      %578 = vmatmul.bf16.gmra.mxu0 %v443
      %v579 = vpop.f32.mrf.mxu0
      %v580 = vadd.f32 0.0, %v579
      %v581 = vpop.f32.mrf.mxu0
      %v582 = vadd.f32 0.0, %v581
      %583 = vdwg.mxu0
      %584 = vmatpush.bf16.msra.mxu0 %v537
      %585 = vmatpush.bf16.msra.mxu0 %v536
      %586 = vmatpush.bf16.msra.mxu0 %v535
      %587 = vmatpush.bf16.msra.mxu0 %v534
      %588 = vmatpush.bf16.msra.mxu0 %v533
      %589 = vmatpush.bf16.msra.mxu0 %v532
      %590 = vmatpush.bf16.msra.mxu0 %v531
      %591 = vmatpush.bf16.msra.mxu0 %v530
      %592 = vmatmul.bf16.gmra.mxu0 %v441
      %v593 = vpop.f32.mrf.mxu0
      %v594 = vadd.f32 %v575, %v593
      %v595 = vpop.f32.mrf.mxu0
      %v596 = vadd.f32 %v577, %v595
      %597 = vmatmul.bf16.gmra.mxu0 %v444
      %v598 = vpop.f32.mrf.mxu0
      %v599 = vadd.f32 %v580, %v598
      %v600 = vpop.f32.mrf.mxu0
      %v601 = vadd.f32 %v582, %v600
      %602 = vdwg.mxu0
      %603 = vmatpush.bf16.msra.mxu0 0
      %604 = vmatpush.bf16.msra.mxu0 0
      %605 = vmatpush.bf16.msra.mxu0 0
      %606 = vmatpush.bf16.msra.mxu0 0
      %607 = vmatpush.bf16.msra.mxu0 0
      %608 = vmatpush.bf16.msra.mxu0 0
      %609 = vmatpush.bf16.msra.mxu0 %v539
      %610 = vmatpush.bf16.msra.mxu0 %v538
      %611 = vmatmul.bf16.gmra.mxu0 %v560
      %v612 = vpop.f32.mrf.mxu0
      %v613 = vadd.f32 %v594, %v612
      %v614 = vpop.f32.mrf.mxu0
      %v615 = vadd.f32 %v596, %v614
      %616 = vmatmul.bf16.gmra.mxu0 %v563
      %v617 = vpop.f32.mrf.mxu0
      %v618 = vadd.f32 %v599, %v617
      %v619 = vpop.f32.mrf.mxu0
      %v620 = vadd.f32 %v601, %v619
      %621 = vdwg.mxu0
      %622 = vadd.xlane.f32.xlu0 %v613
      %v623 = vpop.xlane.xlu0 %622
      %624 = vadd.xlane.f32.xlu0 %v615
      %v625 = vpop.xlane.xlu0 %624
      %626 = vadd.xlane.f32.xlu0 %v618
      %v627 = vpop.xlane.xlu0 %626
      %628 = vadd.xlane.f32.xlu0 %v620
      %v629 = vpop.xlane.xlu0 %628
      %v630 = vmul.f32 %v613, %v613
      %v631 = vmul.f32 %v615, %v615
      %v632 = vmul.f32 %v618, %v618
      %v633 = vmul.f32 %v620, %v620
      %634 = vadd.xlane.f32.xlu0 %v630
      %v635 = vpop.xlane.xlu0 %634
      %636 = vadd.xlane.f32.xlu0 %v631
      %v637 = vpop.xlane.xlu0 %636
      %638 = vadd.xlane.f32.xlu0 %v632
      %v639 = vpop.xlane.xlu0 %638
      %640 = vadd.xlane.f32.xlu0 %v633
      %v641 = vpop.xlane.xlu0 %640
      %vm642 = vcmask 7168
      %v643 = vsel %vm642, %v623, %v635
      %v644 = vsel %vm642, %v625, %v637
      %v645 = vsel %vm642, %v627, %v639
      %v646 = vsel %vm642, %v629, %v641
      %v647 = vld [vmem:[%s349] sm:$0xff]
      %v648 = vld [vmem:[%s349 + $0x8] sm:$0xff]
      %v649 = vld [vmem:[%s349 + $0x10] sm:$0xff]
      %v650 = vld [vmem:[%s349 + $0x18] sm:$0xff]
      %v652 = vsel %vm558, %v647, 0
      %v655 = vsel %vm558, %v648, 0
      %v658 = vsel %vm558, %v649, 0
      %v661 = vsel %vm558, %v650, 0
      %663 = vmatpush.msra.mxu0 0.0
      %664 = vmatpush.msra.mxu0 0.0
      %665 = vmatpush.msra.mxu0 0.0
      %666 = vmatpush.msra.mxu0 0.0
      %667 = vmatpush.msra.mxu0 0.0
      %668 = vmatpush.msra.mxu0 0.0
      %669 = vmatpush.msra.mxu0 0.0
      %670 = vmatpush.msra.mxu0 0.0
      %671 = vmatpush.msra.mxu0 0.0
      %672 = vmatpush.msra.mxu0 0.0
      %673 = vmatpush.msra.mxu0 0.0
      %674 = vmatpush.msra.mxu0 0.0
      %675 = vmatpush.msra.mxu0 %v646
      %676 = vmatpush.msra.mxu0 %v645
      %677 = vmatpush.msra.mxu0 %v644
      %678 = vmatpush.msra.mxu0 %v643
      %679 = vmatmul.f32.gmra.mxu0 %v652
      %v680 = vpop.f32.mrf.mxu0
      %v681 = vadd.f32 0.0, %v680
      %682 = vmatmul.f32.gmra.mxu0 %v655
      %v683 = vpop.f32.mrf.mxu0
      %v684 = vadd.f32 0.0, %v683
      %685 = vmatmul.f32.gmra.mxu0 %v658
      %v686 = vpop.f32.mrf.mxu0
      %v687 = vadd.f32 0.0, %v686
      %688 = vmatmul.f32.gmra.mxu0 %v661
      %v689 = vpop.f32.mrf.mxu0
      %v690 = vadd.f32 0.0, %v689
      %691 = vdwg.mxu0
      %v692 = vmul.f32 %v681, %v681
      %v693 = vmul.f32 %v684, %v684
      %v694 = vmul.f32 %v687, %v687
      %v695 = vmul.f32 %v690, %v690
      %700 = vrot.lane.b32.xlu0 %v692, 1
      %v701 = vpop.permute.xlu0 %700
      %702 = vrot.lane.b32.xlu0 %v693, 1
      %v703 = vpop.permute.xlu0 %702
      %704 = vrot.lane.b32.xlu0 %v694, 1
      %v705 = vpop.permute.xlu0 %704
      %706 = vrot.lane.b32.xlu0 %v695, 1
      %v707 = vpop.permute.xlu0 %706
      %v712 = vsub.f32 %v681, %v701
      %v713 = vsub.f32 %v684, %v703
      %v714 = vsub.f32 %v687, %v705
      %v715 = vsub.f32 %v690, %v707
      %v716 = vmax.f32 %v712, 0.0
      %v717 = vmax.f32 %v713, 0.0
      %v718 = vmax.f32 %v714, 0.0
      %v719 = vmax.f32 %v715, 0.0
      %v720 = vadd.f32 %v716, 1e-05
      %v721 = vadd.f32 %v717, 1e-05
      %v722 = vadd.f32 %v718, 1e-05
      %v723 = vadd.f32 %v719, 1e-05
      %v724 = vrsqrt.pop %v720
      %v725 = vmul.f32 %v724, %v720
      %v726 = vmul.f32 %v725, %v724
      %v727 = vmul.f32 0.5, %v726
      %v728 = vsub.f32 1.5, %v727
      %v729 = vmul.f32 %v724, %v728
      %vm730 = vweird.f32 %v720
      %vm731 = vweird.f32 %v724
      %vm732 = vmor %vm730, %vm731
      %v733 = vsel %vm732, %v724, %v729
      %v734 = vrsqrt.pop %v721
      %v735 = vmul.f32 %v734, %v721
      %v736 = vmul.f32 %v735, %v734
      %v737 = vmul.f32 0.5, %v736
      %v738 = vsub.f32 1.5, %v737
      %v739 = vmul.f32 %v734, %v738
      %vm740 = vweird.f32 %v721
      %vm741 = vweird.f32 %v734
      %vm742 = vmor %vm740, %vm741
      %v743 = vsel %vm742, %v734, %v739
      %v744 = vrsqrt.pop %v722
      %v745 = vmul.f32 %v744, %v722
      %v746 = vmul.f32 %v745, %v744
      %v747 = vmul.f32 0.5, %v746
      %v748 = vsub.f32 1.5, %v747
      %v749 = vmul.f32 %v744, %v748
      %vm750 = vweird.f32 %v722
      %vm751 = vweird.f32 %v744
      %vm752 = vmor %vm750, %vm751
      %v753 = vsel %vm752, %v744, %v749
      %v754 = vrsqrt.pop %v723
      %v755 = vmul.f32 %v754, %v723
      %v756 = vmul.f32 %v755, %v754
      %v757 = vmul.f32 0.5, %v756
      %v758 = vsub.f32 1.5, %v757
      %v759 = vmul.f32 %v754, %v758
      %vm760 = vweird.f32 %v723
      %vm761 = vweird.f32 %v754
      %vm762 = vmor %vm760, %vm761
      %v763 = vsel %vm762, %v754, %v759
      %v764 = vld [vmem:[%s354] sm:$0xff]
      %v765 = vld [vmem:[%s354 + $0x8] sm:$0xff]
      %v766 = vld [vmem:[%s354 + $0x10] sm:$0xff]
      %v767 = vld [vmem:[%s354 + $0x18] sm:$0xff]
      %v768 = vsel %vm642, %v681, %v733
      %v769 = vsel %vm642, %v684, %v743
      %v770 = vsel %vm642, %v687, %v753
      %v771 = vsel %vm642, %v690, %v763
      %v773 = vsel %vm558, %v764, 0
      %v776 = vsel %vm558, %v765, 0
      %v779 = vsel %vm558, %v766, 0
      %v782 = vsel %vm558, %v767, 0
      %784 = vmatpush.msra.mxu0 0.0
      %785 = vmatpush.msra.mxu0 0.0
      %786 = vmatpush.msra.mxu0 0.0
      %787 = vmatpush.msra.mxu0 0.0
      %788 = vmatpush.msra.mxu0 0.0
      %789 = vmatpush.msra.mxu0 0.0
      %790 = vmatpush.msra.mxu0 0.0
      %791 = vmatpush.msra.mxu0 0.0
      %792 = vmatpush.msra.mxu0 0.0
      %793 = vmatpush.msra.mxu0 0.0
      %794 = vmatpush.msra.mxu0 0.0
      %795 = vmatpush.msra.mxu0 0.0
      %796 = vmatpush.msra.mxu0 %v771
      %797 = vmatpush.msra.mxu0 %v770
      %798 = vmatpush.msra.mxu0 %v769
      %799 = vmatpush.msra.mxu0 %v768
      %800 = vmatmul.f32.gmra.mxu0 %v773
      %v801 = vpop.f32.mrf.mxu0
      %v802 = vadd.f32 0.0, %v801
      %803 = vmatmul.f32.gmra.mxu0 %v776
      %v804 = vpop.f32.mrf.mxu0
      %v805 = vadd.f32 0.0, %v804
      %806 = vmatmul.f32.gmra.mxu0 %v779
      %v807 = vpop.f32.mrf.mxu0
      %v808 = vadd.f32 0.0, %v807
      %809 = vmatmul.f32.gmra.mxu0 %v782
      %v810 = vpop.f32.mrf.mxu0
      %v811 = vadd.f32 0.0, %v810
      %812 = vdwg.mxu0
      %v813 = vld [vmem:[%s359] sm:$0xff]
      %v814 = vld [vmem:[%s359 + $0x8] sm:$0xff]
      %v815 = vld [vmem:[%s359 + $0x10] sm:$0xff]
      %v816 = vld [vmem:[%s359 + $0x18] sm:$0xff]
      %821 = vrot.lane.b32.xlu0 %v813, 1
      %v822 = vpop.permute.xlu0 %821
      %823 = vrot.lane.b32.xlu0 %v814, 1
      %v824 = vpop.permute.xlu0 %823
      %825 = vrot.lane.b32.xlu0 %v815, 1
      %v826 = vpop.permute.xlu0 %825
      %827 = vrot.lane.b32.xlu0 %v816, 1
      %v828 = vpop.permute.xlu0 %827
      %v833 = vmul.f32 %v802, %v822
      %v834 = vmul.f32 %v805, %v824
      %v835 = vmul.f32 %v808, %v826
      %v836 = vmul.f32 %v811, %v828
      %v837 = vld [vmem:[%s364] sm:$0xff]
      %v838 = vld [vmem:[%s364 + $0x8] sm:$0xff]
      %v839 = vld [vmem:[%s364 + $0x10] sm:$0xff]
      %v840 = vld [vmem:[%s364 + $0x18] sm:$0xff]
      %845 = vrot.lane.b32.xlu0 %v833, 127
      %v846 = vpop.permute.xlu0 %845
      %847 = vrot.lane.b32.xlu0 %v834, 127
      %v848 = vpop.permute.xlu0 %847
      %849 = vrot.lane.b32.xlu0 %v835, 127
      %v850 = vpop.permute.xlu0 %849
      %851 = vrot.lane.b32.xlu0 %v836, 127
      %v852 = vpop.permute.xlu0 %851
      %v857 = vmul.f32 %v802, %v846
      %v858 = vmul.f32 %v805, %v848
      %v859 = vmul.f32 %v808, %v850
      %v860 = vmul.f32 %v811, %v852
      %v861 = vsub.f32 %v837, %v857
      %v862 = vsub.f32 %v838, %v858
      %v863 = vsub.f32 %v839, %v859
      %v864 = vsub.f32 %v840, %v860
      %865 = vset.pattern.permute.xlu0 1
      %866 = vperm.xlu0 %865, %v833
      %v867 = vpop.permute.xlu0 %866
      %869 = vset.pattern.permute.xlu0 1
      %870 = vperm.xlu0 %869, %v834
      %v871 = vpop.permute.xlu0 %870
      %873 = vset.pattern.permute.xlu0 1
      %874 = vperm.xlu0 %873, %v835
      %v875 = vpop.permute.xlu0 %874
      %877 = vset.pattern.permute.xlu0 1
      %878 = vperm.xlu0 %877, %v836
      %v879 = vpop.permute.xlu0 %878
      %v881 = vmul.f32 %v613, %v867
      %v882 = vmul.f32 %v615, %v871
      %v883 = vmul.f32 %v618, %v875
      %v884 = vmul.f32 %v620, %v879
      %886 = vset.pattern.permute.xlu0 0
      %887 = vperm.xlu0 %886, %v861
      %v888 = vpop.permute.xlu0 %887
      %891 = vset.pattern.permute.xlu0 0
      %892 = vperm.xlu0 %891, %v862
      %v893 = vpop.permute.xlu0 %892
      %896 = vset.pattern.permute.xlu0 0
      %897 = vperm.xlu0 %896, %v863
      %v898 = vpop.permute.xlu0 %897
      %901 = vset.pattern.permute.xlu0 0
      %902 = vperm.xlu0 %901, %v864
      %v903 = vpop.permute.xlu0 %902
      %v905 = vadd.f32 %v881, %v888
      %v906 = vadd.f32 %v882, %v893
      %v907 = vadd.f32 %v883, %v898
      %v908 = vadd.f32 %v884, %v903
      %v909 = vmul.f32 %v905, 0.5
      %v910 = vmul.f32 %v906, 0.5
      %v911 = vmul.f32 %v907, 0.5
      %v912 = vmul.f32 %v908, 0.5
      %v913 = vmul.f32 %v905, 0.70710677
      %v914 = vmul.f32 %v906, 0.70710677
      %v915 = vmul.f32 %v907, 0.70710677
      %v916 = vmul.f32 %v908, 0.70710677
      %vm917 = vcmp.ge.f32.partialorder %v913, 0.0
      %vm918 = vcmp.ge.f32.partialorder %v914, 0.0
      %vm919 = vcmp.ge.f32.partialorder %v915, 0.0
      %vm920 = vcmp.ge.f32.partialorder %v916, 0.0
      %v921 = vsel %vm917, 1.0, -1.0
      %v922 = vsel %vm918, 1.0, -1.0
      %v923 = vsel %vm919, 1.0, -1.0
      %v924 = vsel %vm920, 1.0, -1.0
      %v925 = vand.u32 2147483647, %v913
      %v926 = vand.u32 2147483647, %v914
      %v927 = vand.u32 2147483647, %v915
      %v928 = vand.u32 2147483647, %v916
      %v929 = vmul.f32 %v925, 0.3275911
      %v930 = vmul.f32 %v926, 0.3275911
      %v931 = vmul.f32 %v927, 0.3275911
      %v932 = vmul.f32 %v928, 0.3275911
      %v933 = vadd.f32 %v929, 1.0
      %v934 = vadd.f32 %v930, 1.0
      %v935 = vadd.f32 %v931, 1.0
      %v936 = vadd.f32 %v932, 1.0
      %v937 = vrcp.pop %v933
      %v938 = vrcp.pop %v934
      %v939 = vrcp.pop %v935
      %v940 = vrcp.pop %v936
      %v941 = vmul.f32 %v937, 1.0614054
      %v942 = vmul.f32 %v938, 1.0614054
      %v943 = vmul.f32 %v939, 1.0614054
      %v944 = vmul.f32 %v940, 1.0614054
      %v945 = vadd.f32 %v941, -1.4531521
      %v946 = vadd.f32 %v942, -1.4531521
      %v947 = vadd.f32 %v943, -1.4531521
      %v948 = vadd.f32 %v944, -1.4531521
      %v949 = vmul.f32 %v945, %v937
      %v950 = vmul.f32 %v946, %v938
      %v951 = vmul.f32 %v947, %v939
      %v952 = vmul.f32 %v948, %v940
      %v953 = vadd.f32 %v949, 1.4214138
      %v954 = vadd.f32 %v950, 1.4214138
      %v955 = vadd.f32 %v951, 1.4214138
      %v956 = vadd.f32 %v952, 1.4214138
      %v957 = vmul.f32 %v953, %v937
      %v958 = vmul.f32 %v954, %v938
      %v959 = vmul.f32 %v955, %v939
      %v960 = vmul.f32 %v956, %v940
      %v961 = vadd.f32 %v957, -0.28449672
      %v962 = vadd.f32 %v958, -0.28449672
      %v963 = vadd.f32 %v959, -0.28449672
      %v964 = vadd.f32 %v960, -0.28449672
      %v965 = vmul.f32 %v961, %v937
      %v966 = vmul.f32 %v962, %v938
      %v967 = vmul.f32 %v963, %v939
      %v968 = vmul.f32 %v964, %v940
      %v969 = vadd.f32 %v965, 0.2548296
      %v970 = vadd.f32 %v966, 0.2548296
      %v971 = vadd.f32 %v967, 0.2548296
      %v972 = vadd.f32 %v968, 0.2548296
      %v973 = vmul.f32 %v969, %v937
      %v974 = vmul.f32 %v970, %v938
      %v975 = vmul.f32 %v971, %v939
      %v976 = vmul.f32 %v972, %v940
      %v977 = vsub.f32 0.0, %v925
      %v978 = vsub.f32 0.0, %v926
      %v979 = vsub.f32 0.0, %v927
      %v980 = vsub.f32 0.0, %v928
      %v981 = vmul.f32 %v977, %v925
      %v982 = vmul.f32 %v978, %v926
      %v983 = vmul.f32 %v979, %v927
      %v984 = vmul.f32 %v980, %v928
      %v985 = vmul.f32 %v981, 1.442695
      %v986 = vpow.pop %v985
      %v987 = vmul.f32 %v982, 1.442695
      %v988 = vpow.pop %v987
      %v989 = vmul.f32 %v983, 1.442695
      %v990 = vpow.pop %v989
      %v991 = vmul.f32 %v984, 1.442695
      %v992 = vpow.pop %v991
      %v993 = vmul.f32 %v973, %v986
      %v994 = vmul.f32 %v974, %v988
      %v995 = vmul.f32 %v975, %v990
      %v996 = vmul.f32 %v976, %v992
      %v997 = vsub.f32 1.0, %v993
      %v998 = vsub.f32 1.0, %v994
      %v999 = vsub.f32 1.0, %v995
      %v1000 = vsub.f32 1.0, %v996
      %v1001 = vmul.f32 %v921, %v997
      %v1002 = vmul.f32 %v922, %v998
      %v1003 = vmul.f32 %v923, %v999
      %v1004 = vmul.f32 %v924, %v1000
      %v1005 = vadd.f32 %v1001, 1.0
      %v1006 = vadd.f32 %v1002, 1.0
      %v1007 = vadd.f32 %v1003, 1.0
      %v1008 = vadd.f32 %v1004, 1.0
      %v1009 = vmul.f32 %v909, %v1005
      %v1010 = vmul.f32 %v910, %v1006
      %v1011 = vmul.f32 %v911, %v1007
      %v1012 = vmul.f32 %v912, %v1008
      %1013 = vst [vmem:[%s373] sm:$0xff] %v1009
      %1014 = vst [vmem:[%s373 + $0x8] sm:$0xff] %v1010
      %1015 = vst [vmem:[%s373 + $0x10] sm:$0xff] %v1011
      %1016 = vst [vmem:[%s373 + $0x18] sm:$0xff] %v1012
      %s1017 = smul.u32 4, %s22
      %p1018 = scmp.lt.s32.totalorder %s21, 1
      %s1019 = scalar_select %p1018, %s21, 1
      %p1020 = scmp.lt.s32.totalorder %s1017, 3
      %s1021 = scalar_select %p1020, %s1017, 3
      %s1022 = smul.addr %s1019, 4
      %s1023 = sadd.s32 %s1021, %s1022
      %s1024 = smul.addr %s1023, 8
      %s1025 = scalar_lea.vmem %s6, %s1024
      // Predicated region
      $region45: #{_downsample_impl.3} parent=43 // pred_check
        %p1026 = pneg %p205
      $region46: #{_downsample_impl.3} parent=43 // pred_check_branch
        %1028 = sbr.rel (%p1026) target = $region48
      $region47: #{_downsample_impl.3} parent=43 // pred_region
        %s1029 = smul.u32 4, %s22
      $region48: #{_downsample_impl.3} parent=43 // pred_fallthru
        _
    $region44: #{_downsample_impl.3} parent=5 // pred_fallthru
      _
    %p1030 = scmp.le.s32.totalorder 2, %s12
    // Predicated region
    $region49: #{_downsample_impl.3} parent=5 // pred_check
      %p1031 = pneg %p1030
    $region50: #{_downsample_impl.3} parent=5 // pred_check_branch
      %1033 = sbr.rel (%p1031) target = $region52
    $region51: #{_downsample_impl.3} parent=5 // pred_region
      %s1034 = ssub.s32 %s12, 2
      // Predicated region
      $region53: #{_downsample_impl.3} parent=51 // pred_check
        %p1035 = pneg %p211
      $region54: #{_downsample_impl.3} parent=51 // pred_check_branch
        %1037 = sbr.rel (%p1035) target = $region56
      $region55: #{_downsample_impl.3} parent=51 // pred_region
        %s1038 = smul.u32 4, %s24
        %p1039 = scmp.lt.s32.totalorder %s23, 1
        %s1040 = scalar_select %p1039, %s23, 1
        %p1041 = scmp.lt.s32.totalorder %s1038, 3
        %s1042 = scalar_select %p1041, %s1038, 3
        %s1043 = smul.addr %s1040, 4
        %s1044 = sadd.s32 %s1042, %s1043
        %s1045 = smul.addr %s1044, 8
        %s1046 = scalar_lea.vmem %s6, %s1045
      $region56: #{_downsample_impl.3} parent=51 // pred_fallthru
        _
    $region52: #{_downsample_impl.3} parent=5 // pred_fallthru
      _
  $region6: #{_downsample_impl.3} parent=0 // loop_footer
    %s16 = sadd.s32 1, %s12
  $region7: #{_downsample_impl.3} parent=0 // loop_footer_branch
    %11 = sbr.rel target = $region3
  $region8: #{_downsample_impl.3} parent=0 // loop_exit
    _

</llo_original>
